<compile_context>
chip_gen: v6e
topology: v6e:2x2x1
jax: 0.10.0
libtpu: 0.0.40
codegen_flags: <defaults>
</compile_context>

<pallas_src>
import functools

import jax
import jax.numpy as jnp
import numpy as np
from jax import lax
from jax.experimental import pallas as pl
from jax.experimental.pallas import tpu as pltpu

BN_EPS = 1e-5


def _attention_kernel(q_tile, x_ref, mt_ref, vq_ref, scale_ref, shift_ref,
                      w1_ref, b1_ref, w2_ref, b2_ref, o_ref):
    """One grid step == one batch element.  x layout: (C, HW) bf16; o: (C, HW) f32."""
    C, HW = x_ref.shape
    n_chunks = HW // q_tile

    mt = mt_ref[...]                                   # (C, C) bf16 == (Wq^T Wk)^T
    # j-varying energy bias crow[0, j] = (Wk^T bq) . x_j  (row-constant terms cancel
    # under the row-wise softmax, so bk never appears).
    crow = jnp.dot(vq_ref[...], x_ref[...],
                   preferred_element_type=jnp.float32)           # (1, HW) f32
    scale = scale_ref[...]                             # (C, 1): gamma * bn_w / sqrt(var+eps)
    shift = shift_ref[...]                             # (C, 1): bn_b - bn_mean * (...)
    ones_row = jnp.ones((1, HW), jnp.bfloat16)         # softmax denominator via tiny MXU op

    def chunk(q, pool):
        q0 = pl.multiple_of(q * q_tile, q_tile)
        xq = x_ref[:, pl.ds(q0, q_tile)]                                       # (C, T) bf16
        # energy[i, j] = x_{q0+i}^T (Wq^T Wk) x_j + crow[j]
        xm_q = jnp.dot(mt, xq, preferred_element_type=jnp.float32)             # (C, T) f32
        # TN form (same as flash-attention bwd dv): only the small (C, T) lhs could ever
        # need a relayout; the (C, HW) rhs / (T, HW) softmax tile never hit the XLU.
        energy = lax.dot_general(xm_q.astype(jnp.bfloat16), x_ref[...],
                                 (((0,), (0,)), ((), ())),
                                 preferred_element_type=jnp.float32)           # (T, HW)
        energy = energy + crow
        energy = energy - jnp.max(energy, axis=-1, keepdims=True)
        # TODO(synk): on v6e/v7x the exp could run in bf16 (EUP is the hot slot at small
        # C); kept f32 since v5e has no bf16 EUP path and it tightens numerics.
        p = jnp.exp(energy)                                                    # (T, HW) f32
        p_bf = p.astype(jnp.bfloat16)
        # Un-normalized attention matmuls (NT form == flash-attention q.k^T); softmax
        # normalization is deferred to the small (C, T) epilogue below.
        pam = lax.dot_general(x_ref[...], p_bf, (((1,), (1,)), ((), ())),
                              preferred_element_type=jnp.float32)              # (C, T)
        denom = lax.dot_general(ones_row, p_bf, (((1,), (1,)), ((), ())),
                                preferred_element_type=jnp.float32)            # (1, T)
        inv = pl.reciprocal(denom, approx=True)                                # EUP slot
        # normalization + gamma/BN fold + residual in one (C, T) VPU pass
        pam = pam * inv * scale + shift + xq.astype(jnp.float32)
        o_ref[:, pl.ds(q0, q_tile)] = pam
        return pool + jnp.sum(pam, axis=-1, keepdims=True)

    pool = lax.fori_loop(0, n_chunks, chunk, jnp.zeros((C, 1), jnp.float32))

    # ---- SE: global avg pool -> fc1 -> relu -> fc2 -> sigmoid -> channel scale ----
    s = pool * (1.0 / HW)                                                      # (C, 1)
    h = jnp.dot(w1_ref[...], s, preferred_element_type=jnp.float32) + b1_ref[...]
    h = jnp.maximum(h, 0.0)                                                    # (Cr, 1)
    e = jnp.dot(w2_ref[...], h, preferred_element_type=jnp.float32) + b2_ref[...]
    e = 1.0 / (1.0 + jnp.exp(-e))                                              # sigmoid, (C, 1)
    o_ref[...] = o_ref[...] * e


def _vmem_capacity_bytes():
    try:
        return int(pltpu.get_tpu_info().vmem_capacity_bytes)
    except Exception:
        return 64 << 20          # conservative default (v7x: 64 MiB per TensorCore)


def _pick_q_tile(hw, vmem_cap):
    # Bound the live (q_tile, HW) f32/bf16 softmax intermediates.  On 64 MiB parts (v7x)
    # cap the tile at 256; on 128 MiB parts (v5e/v6e) allow up to 1024 (fewer full
    # re-streams of the (C, HW) operand per batch element).
    max_tile = 1024 if vmem_cap >= (96 << 20) else 256
    for t in (1024, 512, 256, 128):
        if t <= max_tile and hw >= t and hw % t == 0:
            return t
    return hw


def attention_module(x_nchw, wq, bq, wk, bk, gamma,
                     bn_w, bn_b, bn_rm, bn_rv, w1, b1, w2, b2, q_tile=None):
    """Forward pass of Attention_Module (PAM + SE), BatchNorm folded in eval mode.

    `bk` is accepted for interface parity but drops out exactly: its energy
    contribution is constant along the softmax axis.
    """
    B, C, H, W = x_nchw.shape
    HW = H * W
    Cr = w1.shape[0]

    vmem_cap = _vmem_capacity_bytes()
    if q_tile is None:
        q_tile = _pick_q_tile(HW, vmem_cap)
    assert HW % q_tile == 0

    # (B, C, HW) bf16: same memory order as torch .view(B, C, H*W) (no host transposes),
    # half the HBM->VMEM DMA bytes, pixels on the 128-wide lane axis.
    x_flat = x_nchw.reshape(B, C, HW).astype(jnp.bfloat16)

    # Fold the two 1x1 convs into one bilinear form (MXU contraction depth C, not C//8).
    mt = (wk.T @ wq).astype(jnp.bfloat16)                   # (C, C) == (Wq^T Wk)^T
    vq = (wk.T @ bq).reshape(1, C).astype(jnp.bfloat16)     # (1, C) == (Wk^T bq)^T

    # Fold gamma + eval-mode BatchNorm into a per-channel scale / shift.
    # TODO(synk): PyTorch's default .train() BN uses batch statistics; eval-mode here.
    s0 = bn_w / jnp.sqrt(bn_rv + BN_EPS)
    scale = (gamma * s0).reshape(C, 1).astype(jnp.float32)
    shift = (bn_b - bn_rm * s0).reshape(C, 1).astype(jnp.float32)

    args = (x_flat, mt, vq, scale, shift,
            w1.astype(jnp.float32), b1.reshape(Cr, 1).astype(jnp.float32),
            w2.astype(jnp.float32), b2.reshape(C, 1).astype(jnp.float32))

    full = lambda shape: pl.BlockSpec(shape, lambda b: (0,) * len(shape))

    # Per-step VMEM: double-buffered bf16 x block + f32 out block (12 B/elem of C*HW),
    # live f32 energy/p + bf16 p tiles (10 B/elem of q_tile*HW), plus small operands.
    vmem_est = 12 * C * HW + 10 * q_tile * HW + 4 * (C * C + 8 * C)
    # Leave headroom for compiler-internal scratch: never request more than ~75% of
    # physical VMEM (v7x: <=48 MiB of 64; v5e/v6e: <=96 MiB of 128).  Always set the
    # limit explicitly (v5e's scoped default is only 16 MiB).
    vmem_budget = min(vmem_cap - (16 << 20), (3 * vmem_cap) // 4)
    vmem_limit = int(min(max(int(1.5 * vmem_est), 32 << 20), vmem_budget))

    out_flat = pl.pallas_call(
        functools.partial(_attention_kernel, q_tile),
        # TODO(synk): output kept f32 for residual/BN precision; use bf16 out_shape if
        # downstream consumers accept it (halves writeback bytes and output VMEM).
        out_shape=jax.ShapeDtypeStruct((B, C, HW), jnp.float32),
        grid_spec=pltpu.PrefetchScalarGridSpec(
            num_scalar_prefetch=0,
            grid=(B,),
            in_specs=[
                pl.BlockSpec((None, C, HW), lambda b: (b, 0, 0)),   # x, one batch / step
                full((C, C)),                                       # (Wq^T Wk)^T    bf16
                full((1, C)),                                       # (Wk^T bq)^T    bf16
                full((C, 1)), full((C, 1)),                         # folded BN scale/shift
                full((Cr, C)), full((Cr, 1)),                       # SE fc1
                full((C, Cr)), full((C, 1)),                        # SE fc2
            ],
            out_specs=pl.BlockSpec((None, C, HW), lambda b: (b, 0, 0)),
        ),
        compiler_params=pltpu.CompilerParams(
            dimension_semantics=("parallel",),
            vmem_limit_bytes=vmem_limit),
    )(*args)
    # TODO(synk): on v7x (2 TensorCores) a B=1 call leaves one core idle; if B can be 1,
    # split the q-chunk axis into a parallel grid dim and apply SE as a tiny second pass.
    # TODO(synk): for very large HW on v7x, add flash-style key blocking inside the chunk
    # so the live temporaries shrink from (q_tile, HW) to (q_tile, k_tile).

    return out_flat.reshape(B, C, H, W)


def reference(x, wq, bq, wk, bk, gamma, bn_w, bn_b, bn_rm, bn_rv, w1, b1, w2, b2):
    """Pure-JAX mirror of the PyTorch forward (NCHW), BN in eval mode."""
    B, C, H, W = x.shape
    HW = H * W
    x2 = x.reshape(B, C, HW)
    q = jnp.einsum('oc,bcn->bon', wq, x2) + bq[None, :, None]
    k = jnp.einsum('oc,bcn->bon', wk, x2) + bk[None, :, None]
    energy = jnp.einsum('boi,boj->bij', q, k)                 # (B, HW, HW)
    attn = jax.nn.softmax(energy, axis=-1)
    out = jnp.einsum('bcj,bij->bci', x2, attn)                # bmm(x_view, attn^T)
    out = gamma * out
    out = ((out - bn_rm[None, :, None]) / jnp.sqrt(bn_rv[None, :, None] + BN_EPS)
           * bn_w[None, :, None] + bn_b[None, :, None])
    pam = out.reshape(B, C, H, W) + x
    s = jnp.mean(pam, axis=(2, 3))                            # (B, C)
    h = jnp.maximum(s @ w1.T + b1, 0.0)                       # (B, Cr)
    e = jax.nn.sigmoid(h @ w2.T + b2)                         # (B, C)
    return pam * e[:, :, None, None]


if __name__ == "__main__":
    B, C, H, W = 2, 32, 16, 16          # HW = 256: lane-dense (multiple of 128)
    C8, Cr = C // 8, C // 16            # PAM query/key dim, SE reduction=16

    key = jax.random.PRNGKey(0)
    ks = jax.random.split(key, 13)

    x = jax.random.normal(ks[0], (B, C, H, W), jnp.float32)

    wq = jax.random.normal(ks[1], (C8, C), jnp.float32) / jnp.sqrt(C)
    bq = 0.1 * jax.random.normal(ks[2], (C8,), jnp.float32)
    wk = jax.random.normal(ks[3], (C8, C), jnp.float32) / jnp.sqrt(C)
    bk = 0.1 * jax.random.normal(ks[4], (C8,), jnp.float32)

    # PyTorch initializes gamma to 0 (making the PAM branch a no-op); use a non-zero
    # value so the attention path is actually exercised.
    gamma = jnp.float32(0.5)

    bn_w = 1.0 + 0.1 * jax.random.normal(ks[5], (C,), jnp.float32)
    bn_b = 0.1 * jax.random.normal(ks[6], (C,), jnp.float32)
    bn_rm = 0.1 * jax.random.normal(ks[7], (C,), jnp.float32)
    bn_rv = 1.0 + 0.1 * jnp.abs(jax.random.normal(ks[8], (C,), jnp.float32))

    w1 = jax.random.normal(ks[9], (Cr, C), jnp.float32) / jnp.sqrt(C)
    b1 = 0.1 * jax.random.normal(ks[10], (Cr,), jnp.float32)
    w2 = jax.random.normal(ks[11], (C, Cr), jnp.float32) / jnp.sqrt(Cr)
    b2 = 0.1 * jax.random.normal(ks[12], (C,), jnp.float32)

    params = (wq, bq, wk, bk, gamma, bn_w, bn_b, bn_rm, bn_rv, w1, b1, w2, b2)

    # q_tile=128 exercises the chunked-softmax fori_loop path (2 row chunks at HW=256).
    out = jax.block_until_ready(attention_module(x, *params, q_tile=128))
    ref = jax.block_until_ready(reference(x, *params))

    np.testing.assert_allclose(np.asarray(out), np.asarray(ref), rtol=2e-2, atol=2e-2)
    print("KERNEL_OK")
</pallas_src>

<mosaic_0001>
module attributes {stable_mosaic.version = 11 : i64} {
  func.func @_attention_kernel(%arg0: i32, %arg1: memref<1x32x256xbf16, #tpu.memory_space<vmem>>, %arg2: memref<32x32xbf16, #tpu.memory_space<vmem>>, %arg3: memref<1x32xbf16, #tpu.memory_space<vmem>>, %arg4: memref<32x1xf32, #tpu.memory_space<vmem>>, %arg5: memref<32x1xf32, #tpu.memory_space<vmem>>, %arg6: memref<2x32xf32, #tpu.memory_space<vmem>>, %arg7: memref<2x1xf32, #tpu.memory_space<vmem>>, %arg8: memref<32x2xf32, #tpu.memory_space<vmem>>, %arg9: memref<32x1xf32, #tpu.memory_space<vmem>>, %arg10: memref<1x32x256xf32, #tpu.memory_space<vmem>>) attributes {dimension_semantics = [#tpu.dimension_semantics<parallel>], iteration_bounds = array<i64: 2>, scalar_prefetch = 0 : i64, scratch_operands = 0 : i64, tpu.core_type = #tpu.core_type<tc>, window_params = [{transform_indices = @transform_0, window_bounds = array<i64: 1, 32, 256>}, {pipeline_mode = #tpu.pipeline_mode<synchronous>, transform_indices = @transform_1, window_bounds = array<i64: 32, 32>}, {pipeline_mode = #tpu.pipeline_mode<synchronous>, transform_indices = @transform_2, window_bounds = array<i64: 1, 32>}, {pipeline_mode = #tpu.pipeline_mode<synchronous>, transform_indices = @transform_3, window_bounds = array<i64: 32, 1>}, {pipeline_mode = #tpu.pipeline_mode<synchronous>, transform_indices = @transform_4, window_bounds = array<i64: 32, 1>}, {pipeline_mode = #tpu.pipeline_mode<synchronous>, transform_indices = @transform_5, window_bounds = array<i64: 2, 32>}, {pipeline_mode = #tpu.pipeline_mode<synchronous>, transform_indices = @transform_6, window_bounds = array<i64: 2, 1>}, {pipeline_mode = #tpu.pipeline_mode<synchronous>, transform_indices = @transform_7, window_bounds = array<i64: 32, 2>}, {pipeline_mode = #tpu.pipeline_mode<synchronous>, transform_indices = @transform_8, window_bounds = array<i64: 32, 1>}, {transform_indices = @transform_9, window_bounds = array<i64: 1, 32, 256>}]} {
    %c0 = arith.constant 0 : index
    %c0_0 = arith.constant 0 : index
    %0 = vector.load %arg2[%c0, %c0_0] : memref<32x32xbf16, #tpu.memory_space<vmem>>, vector<32x32xbf16>
    %c0_1 = arith.constant 0 : index
    %c0_2 = arith.constant 0 : index
    %1 = vector.load %arg3[%c0_1, %c0_2] : memref<1x32xbf16, #tpu.memory_space<vmem>>, vector<1x32xbf16>
    %c0_3 = arith.constant 0 : index
    %c0_4 = arith.constant 0 : index
    %c0_5 = arith.constant 0 : index
    %2 = vector.load %arg1[%c0_3, %c0_4, %c0_5] : memref<1x32x256xbf16, #tpu.memory_space<vmem>>, vector<1x32x256xbf16>
    %3 = vector.shape_cast %2 : vector<1x32x256xbf16> to vector<32x256xbf16>
    %cst = arith.constant dense<0.000000e+00> : vector<1x256xf32>
    %4 = tpu.matmul %1, %3, %cst {dimension_numbers = #tpu.dot_dimension_numbers<[1], [0], [0], [1], [0, 0, 1, 1], [], []>} : vector<1x32xbf16>, vector<32x256xbf16>, vector<1x256xf32> -> vector<1x256xf32>
    %c0_6 = arith.constant 0 : index
    %c0_7 = arith.constant 0 : index
    %5 = vector.load %arg4[%c0_6, %c0_7] : memref<32x1xf32, #tpu.memory_space<vmem>>, vector<32x1xf32>
    %c0_8 = arith.constant 0 : index
    %c0_9 = arith.constant 0 : index
    %6 = vector.load %arg5[%c0_8, %c0_9] : memref<32x1xf32, #tpu.memory_space<vmem>>, vector<32x1xf32>
    %cst_10 = arith.constant 1.000000e+00 : bf16
    %7 = vector.broadcast %cst_10 : bf16 to vector<1x256xbf16>
    %cst_11 = arith.constant 0.000000e+00 : f32
    %8 = vector.broadcast %cst_11 : f32 to vector<32x1xf32>
    %c0_i32 = arith.constant 0 : i32
    %c2_i32 = arith.constant 2 : i32
    %9 = arith.addi %c0_i32, %c2_i32 : i32
    %c1_i32 = arith.constant 1 : i32
    %10 = scf.for %arg11 = %c0_i32 to %9 step %c1_i32 iter_args(%arg12 = %8) -> (vector<32x1xf32>)  : i32 {
      %c128_i32 = arith.constant 128 : i32
      %37 = arith.muli %arg11, %c128_i32 : i32
      %38 = tpu.assume_multiple %37, 128 : i32
      %c0_34 = arith.constant 0 : index
      %c0_35 = arith.constant 0 : index
      %39 = arith.index_cast %38 : i32 to index
      %40 = vector.load %arg1[%c0_34, %c0_35, %39] : memref<1x32x256xbf16, #tpu.memory_space<vmem>>, vector<1x32x128xbf16>
      %41 = vector.shape_cast %40 : vector<1x32x128xbf16> to vector<32x128xbf16>
      %cst_36 = arith.constant dense<0.000000e+00> : vector<32x128xf32>
      %42 = tpu.matmul %0, %41, %cst_36 {dimension_numbers = #tpu.dot_dimension_numbers<[1], [0], [0], [1], [0, 0, 1, 1], [], []>} : vector<32x32xbf16>, vector<32x128xbf16>, vector<32x128xf32> -> vector<32x128xf32>
      %43 = arith.truncf %42 : vector<32x128xf32> to vector<32x128xbf16>
      %c0_37 = arith.constant 0 : index
      %c0_38 = arith.constant 0 : index
      %c0_39 = arith.constant 0 : index
      %44 = vector.load %arg1[%c0_37, %c0_38, %c0_39] : memref<1x32x256xbf16, #tpu.memory_space<vmem>>, vector<1x32x256xbf16>
      %45 = vector.shape_cast %44 : vector<1x32x256xbf16> to vector<32x256xbf16>
      %cst_40 = arith.constant dense<0.000000e+00> : vector<128x256xf32>
      %46 = tpu.matmul %43, %45, %cst_40 {dimension_numbers = #tpu.dot_dimension_numbers<[0], [0], [1], [1], [0, 1, 1, 1], [], []>} : vector<32x128xbf16>, vector<32x256xbf16>, vector<128x256xf32> -> vector<128x256xf32>
      %47 = vector.broadcast %4 : vector<1x256xf32> to vector<128x256xf32>
      %48 = arith.addf %46, %47 : vector<128x256xf32>
      %cst_41 = arith.constant dense<0xFF800000> : vector<128xf32>
      %49 = vector.multi_reduction <maximumf>, %48, %cst_41 [1] : vector<128x256xf32> to vector<128xf32>
      %50 = vector.shape_cast %49 : vector<128xf32> to vector<128x1xf32>
      %51 = vector.broadcast %50 : vector<128x1xf32> to vector<128x256xf32>
      %52 = arith.subf %48, %51 : vector<128x256xf32>
      %53 = math.exp %52 : vector<128x256xf32>
      %54 = arith.truncf %53 : vector<128x256xf32> to vector<128x256xbf16>
      %c0_42 = arith.constant 0 : index
      %c0_43 = arith.constant 0 : index
      %c0_44 = arith.constant 0 : index
      %55 = vector.load %arg1[%c0_42, %c0_43, %c0_44] : memref<1x32x256xbf16, #tpu.memory_space<vmem>>, vector<1x32x256xbf16>
      %56 = vector.shape_cast %55 : vector<1x32x256xbf16> to vector<32x256xbf16>
      %cst_45 = arith.constant dense<0.000000e+00> : vector<32x128xf32>
      %57 = tpu.matmul %56, %54, %cst_45 {dimension_numbers = #tpu.dot_dimension_numbers<[1], [1], [0], [0], [0, 0, 1, 0], [], []>} : vector<32x256xbf16>, vector<128x256xbf16>, vector<32x128xf32> -> vector<32x128xf32>
      %cst_46 = arith.constant dense<0.000000e+00> : vector<1x128xf32>
      %58 = tpu.matmul %7, %54, %cst_46 {dimension_numbers = #tpu.dot_dimension_numbers<[1], [1], [0], [0], [0, 0, 1, 0], [], []>} : vector<1x256xbf16>, vector<128x256xbf16>, vector<1x128xf32> -> vector<1x128xf32>
      %59 = tpu.reciprocal %58 {approx = true} : vector<1x128xf32> -> vector<1x128xf32>
      %60 = vector.broadcast %59 : vector<1x128xf32> to vector<32x128xf32>
      %61 = arith.mulf %57, %60 : vector<32x128xf32>
      %62 = vector.broadcast %5 : vector<32x1xf32> to vector<32x128xf32>
      %63 = arith.mulf %61, %62 : vector<32x128xf32>
      %64 = vector.broadcast %6 : vector<32x1xf32> to vector<32x128xf32>
      %65 = arith.addf %63, %64 : vector<32x128xf32>
      %66 = arith.extf %41 : vector<32x128xbf16> to vector<32x128xf32>
      %67 = arith.addf %65, %66 : vector<32x128xf32>
      %c0_47 = arith.constant 0 : index
      %c0_48 = arith.constant 0 : index
      %68 = arith.index_cast %38 : i32 to index
      %69 = vector.load %arg10[%c0_47, %c0_48, %68] : memref<1x32x256xf32, #tpu.memory_space<vmem>>, vector<1x32x128xf32>
      %70 = vector.shape_cast %69 : vector<1x32x128xf32> to vector<32x128xf32>
      %71 = vector.shape_cast %67 : vector<32x128xf32> to vector<1x32x128xf32>
      tpu.vector_store %arg10[%c0_47, %c0_48, %68], %71 {strides = array<i32>} : memref<1x32x256xf32, #tpu.memory_space<vmem>>, vector<1x32x128xf32>,
      %cst_49 = arith.constant dense<0.000000e+00> : vector<32xf32>
      %72 = vector.multi_reduction <add>, %67, %cst_49 [1] : vector<32x128xf32> to vector<32xf32>
      %73 = vector.shape_cast %72 : vector<32xf32> to vector<32x1xf32>
      %74 = arith.addf %arg12, %73 : vector<32x1xf32>
      scf.yield %74 : vector<32x1xf32>
    }
    %c2_i32_12 = arith.constant 2 : i32
    %cst_13 = arith.constant 3.906250e-03 : f32
    %11 = vector.broadcast %cst_13 : f32 to vector<32x1xf32>
    %12 = arith.mulf %10, %11 : vector<32x1xf32>
    %c0_14 = arith.constant 0 : index
    %c0_15 = arith.constant 0 : index
    %13 = vector.load %arg6[%c0_14, %c0_15] : memref<2x32xf32, #tpu.memory_space<vmem>>, vector<2x32xf32>
    %cst_16 = arith.constant dense<0.000000e+00> : vector<2x1xf32>
    %14 = tpu.matmul %13, %12, %cst_16 {dimension_numbers = #tpu.dot_dimension_numbers<[1], [0], [0], [1], [0, 0, 1, 1], [], []>} : vector<2x32xf32>, vector<32x1xf32>, vector<2x1xf32> -> vector<2x1xf32>
    %c0_17 = arith.constant 0 : index
    %c0_18 = arith.constant 0 : index
    %15 = vector.load %arg7[%c0_17, %c0_18] : memref<2x1xf32, #tpu.memory_space<vmem>>, vector<2x1xf32>
    %16 = arith.addf %14, %15 : vector<2x1xf32>
    %cst_19 = arith.constant 0.000000e+00 : f32
    %17 = vector.broadcast %cst_19 : f32 to vector<2x1xf32>
    %18 = arith.maximumf %16, %17 : vector<2x1xf32>
    %c0_20 = arith.constant 0 : index
    %c0_21 = arith.constant 0 : index
    %19 = vector.load %arg8[%c0_20, %c0_21] : memref<32x2xf32, #tpu.memory_space<vmem>>, vector<32x2xf32>
    %cst_22 = arith.constant dense<0.000000e+00> : vector<32x1xf32>
    %20 = tpu.matmul %19, %18, %cst_22 {dimension_numbers = #tpu.dot_dimension_numbers<[1], [0], [0], [1], [0, 0, 1, 1], [], []>} : vector<32x2xf32>, vector<2x1xf32>, vector<32x1xf32> -> vector<32x1xf32>
    %c0_23 = arith.constant 0 : index
    %c0_24 = arith.constant 0 : index
    %21 = vector.load %arg9[%c0_23, %c0_24] : memref<32x1xf32, #tpu.memory_space<vmem>>, vector<32x1xf32>
    %22 = arith.addf %20, %21 : vector<32x1xf32>
    %cst_25 = arith.constant 0.000000e+00 : f32
    %23 = vector.broadcast %cst_25 : f32 to vector<32x1xf32>
    %24 = arith.subf %23, %22 : vector<32x1xf32>
    %25 = math.exp %24 : vector<32x1xf32>
    %cst_26 = arith.constant 1.000000e+00 : f32
    %26 = vector.broadcast %cst_26 : f32 to vector<32x1xf32>
    %27 = arith.addf %26, %25 : vector<32x1xf32>
    %cst_27 = arith.constant 1.000000e+00 : f32
    %28 = vector.broadcast %cst_27 : f32 to vector<32x1xf32>
    %29 = arith.divf %28, %27 : vector<32x1xf32>
    %c0_28 = arith.constant 0 : index
    %c0_29 = arith.constant 0 : index
    %c0_30 = arith.constant 0 : index
    %30 = vector.load %arg10[%c0_28, %c0_29, %c0_30] : memref<1x32x256xf32, #tpu.memory_space<vmem>>, vector<1x32x256xf32>
    %31 = vector.shape_cast %30 : vector<1x32x256xf32> to vector<32x256xf32>
    %32 = vector.broadcast %29 : vector<32x1xf32> to vector<32x256xf32>
    %33 = arith.mulf %31, %32 : vector<32x256xf32>
    %c0_31 = arith.constant 0 : index
    %c0_32 = arith.constant 0 : index
    %c0_33 = arith.constant 0 : index
    %34 = vector.load %arg10[%c0_31, %c0_32, %c0_33] : memref<1x32x256xf32, #tpu.memory_space<vmem>>, vector<1x32x256xf32>
    %35 = vector.shape_cast %34 : vector<1x32x256xf32> to vector<32x256xf32>
    %36 = vector.shape_cast %33 : vector<32x256xf32> to vector<1x32x256xf32>
    tpu.vector_store %arg10[%c0_31, %c0_32, %c0_33], %36 {strides = array<i32>} : memref<1x32x256xf32, #tpu.memory_space<vmem>>, vector<1x32x256xf32>,
    return
  }
  func.func @transform_0(%arg0: i32) -> (i32, i32, i32) {
    %c0_i32 = arith.constant 0 : i32
    %c0_i32_0 = arith.constant 0 : i32
    %c0_i32_1 = arith.constant 0 : i32
    return %arg0, %c0_i32, %c0_i32_0 : i32, i32, i32
  }
  func.func @transform_1(%arg0: i32) -> (i32, i32) {
    %c0_i32 = arith.constant 0 : i32
    %c0_i32_0 = arith.constant 0 : i32
    %c0_i32_1 = arith.constant 0 : i32
    return %c0_i32, %c0_i32_0 : i32, i32
  }
  func.func @transform_2(%arg0: i32) -> (i32, i32) {
    %c0_i32 = arith.constant 0 : i32
    %c0_i32_0 = arith.constant 0 : i32
    %c0_i32_1 = arith.constant 0 : i32
    return %c0_i32, %c0_i32_0 : i32, i32
  }
  func.func @transform_3(%arg0: i32) -> (i32, i32) {
    %c0_i32 = arith.constant 0 : i32
    %c0_i32_0 = arith.constant 0 : i32
    %c0_i32_1 = arith.constant 0 : i32
    return %c0_i32, %c0_i32_0 : i32, i32
  }
  func.func @transform_4(%arg0: i32) -> (i32, i32) {
    %c0_i32 = arith.constant 0 : i32
    %c0_i32_0 = arith.constant 0 : i32
    %c0_i32_1 = arith.constant 0 : i32
    return %c0_i32, %c0_i32_0 : i32, i32
  }
  func.func @transform_5(%arg0: i32) -> (i32, i32) {
    %c0_i32 = arith.constant 0 : i32
    %c0_i32_0 = arith.constant 0 : i32
    %c0_i32_1 = arith.constant 0 : i32
    return %c0_i32, %c0_i32_0 : i32, i32
  }
  func.func @transform_6(%arg0: i32) -> (i32, i32) {
    %c0_i32 = arith.constant 0 : i32
    %c0_i32_0 = arith.constant 0 : i32
    %c0_i32_1 = arith.constant 0 : i32
    return %c0_i32, %c0_i32_0 : i32, i32
  }
  func.func @transform_7(%arg0: i32) -> (i32, i32) {
    %c0_i32 = arith.constant 0 : i32
    %c0_i32_0 = arith.constant 0 : i32
    %c0_i32_1 = arith.constant 0 : i32
    return %c0_i32, %c0_i32_0 : i32, i32
  }
  func.func @transform_8(%arg0: i32) -> (i32, i32) {
    %c0_i32 = arith.constant 0 : i32
    %c0_i32_0 = arith.constant 0 : i32
    %c0_i32_1 = arith.constant 0 : i32
    return %c0_i32, %c0_i32_0 : i32, i32
  }
  func.func @transform_9(%arg0: i32) -> (i32, i32, i32) {
    %c0_i32 = arith.constant 0 : i32
    %c0_i32_0 = arith.constant 0 : i32
    %c0_i32_1 = arith.constant 0 : i32
    return %arg0, %c0_i32, %c0_i32_0 : i32, i32, i32
  }
}

</mosaic_0001>

<llo_original>
// kernel: tpu_custom_call.1
$region0: #{tpu_custom_call.1}
  #allocation0 [shape = 'u32[]', space=smem, size = 0x4, offset = 0x4, fixed_abs, tag = 'smem constant byte address 0x4 - core index']
  #allocation1 [shape = 'u32[144,128]{1,0:T(1,128)}', space=vmem, size = 0x12000, scoped, tag = 'internal scratch']
  %s0 = inlined_call_operand.vmem [shape: bf16[2,32,256], index: 0, kind: input, shape index: {}]
  %s1 = inlined_call_operand.vmem [shape: bf16[32,32], index: 1, kind: input, shape index: {}]
  %s2 = inlined_call_operand.vmem [shape: bf16[1,32], index: 2, kind: input, shape index: {}]
  %s3 = inlined_call_operand.vmem [shape: f32[32,1], index: 3, kind: input, shape index: {}]
  %s4 = inlined_call_operand.vmem [shape: f32[32,1], index: 4, kind: input, shape index: {}]
  %s5 = inlined_call_operand.vmem [shape: f32[2,32], index: 5, kind: input, shape index: {}]
  %s6 = inlined_call_operand.vmem [shape: f32[2,1], index: 6, kind: input, shape index: {}]
  %s7 = inlined_call_operand.vmem [shape: f32[32,2], index: 7, kind: input, shape index: {}]
  %s8 = inlined_call_operand.vmem [shape: f32[32,1], index: 8, kind: input, shape index: {}]
  %s9 = inlined_call_operand.hbm [shape: f32[2,32,256], index: 9, kind: output, shape index: {}]
  %s10 = sld [smem:[#allocation0]]
  $region76: #{tpu_custom_call.1} parent=0
    _
  %s12 = ssub.s32 1, %s10
  %s13 = scalar_select 0, %s12, %s10
  $region1: #{tpu_custom_call.1} parent=0
    #allocation2 [shape = 'u8[65536]{0}', space=vmem, size = 0x10000, scoped, tag = 'output window, operand 0']
    #allocation3 [shape = 's32[2]{0}', space=sflag, size = 0x8, scoped, tag = 'scoped memory for tpu_custom_call.1']
    %14 = vsyncpa [#allocation3], 0
    %s15 = scalar_lea.sflag [#allocation3], 1
    %16 = vsyncpa %s15, 0
    loop: start=0, step=1, limit=4
    $region2: #{tpu_custom_call.1} parent=1 // loop_pre_header
      _
    $region3: #{tpu_custom_call.1} parent=1 // loop_header
      %s18 = sphi 0, %s22
      %p19 = scmp.ge.s32.totalorder %s18, 4
      %s28 = sphi 0, %s30
      %s31 = sphi 0, %s28
      %s32 = sphi 0, %s31
      %s48 = sphi 0, %s32
      %s52 = sphi 0, %s52
      %s54 = sphi 0, %s52
      %s55 = sphi 0, %s54
      %s69 = sphi 0, %s55
      %s73 = sphi 0, %s73
      %s75 = sphi 0, %s73
      %s76 = sphi 0, %s75
      %s90 = sphi 0, %s76
      %s94 = sphi 0, %s94
      %s96 = sphi 0, %s94
      %s97 = sphi 0, %s96
      %s111 = sphi 0, %s97
      %s115 = sphi 0, %s115
      %s117 = sphi 0, %s115
      %s118 = sphi 0, %s117
      %s132 = sphi 0, %s118
      %s136 = sphi 0, %s136
      %s138 = sphi 0, %s136
      %s139 = sphi 0, %s138
      %s153 = sphi 0, %s139
      %s157 = sphi 0, %s157
      %s159 = sphi 0, %s157
      %s160 = sphi 0, %s159
      %s174 = sphi 0, %s160
      %s178 = sphi 0, %s178
      %s180 = sphi 0, %s178
      %s181 = sphi 0, %s180
      %s195 = sphi 0, %s181
      %s199 = sphi 0, %s199
      %s201 = sphi 0, %s199
      %s202 = sphi 0, %s201
      %s216 = sphi 0, %s202
      %s222 = sphi 0, %s224
      %s225 = sphi 0, %s222
      %s226 = sphi 0, %s225
      %s242 = sphi 0, %s226
    $region4: #{tpu_custom_call.1} parent=1 // loop_header_branch
      %21 = sbr.rel (%p19) target = $region8
    $region5: #{tpu_custom_call.1} parent=1 // loop_body
      %s23 = ssub.s32 %s18, 1
      %s24 = ssub.s32 %s18, 2
      %s25 = sadd.s32 %s18, 1
      %s26 = ssub.s32 %s18, %s25
      %p27 = scmp.eq.s32.totalorder %s26, 0
      %s29 = sadd.s32 %s28, 1
      %s30 = scalar_select %p27, %s28, %s29
      %p33 = pneg %p27
      %p34 = scmp.eq.s32.totalorder %s18, 1
      %p35 = por %p33, %p34
      %p36 = scmp.ne.s32.totalorder %s28, %s31
      %p37 = scmp.eq.s32.totalorder %s18, 0
      %p38 = por %p36, %p37
      %p39 = scmp.ne.s32.totalorder %s28, %s31
      %p40 = scmp.eq.s32.totalorder %s23, 1
      %p41 = por %p39, %p40
      %p42 = scmp.ne.s32.totalorder %s31, %s32
      %p43 = scmp.eq.s32.totalorder %s23, 0
      %p44 = por %p42, %p43
      %p45 = scmp.ne.s32.totalorder %s31, %s32
      %p46 = scmp.eq.s32.totalorder %s24, 1
      %p47 = por %p45, %p46
      %p49 = scmp.ne.s32.totalorder %s32, %s48
      %p50 = scmp.eq.s32.totalorder %s24, 0
      %p51 = por %p49, %p50
      %s53 = sadd.s32 %s52, 1
      %p56 = scmp.eq.s32.totalorder %s18, 1
      %p57 = scmp.ne.s32.totalorder %s52, %s54
      %p58 = scmp.eq.s32.totalorder %s18, 0
      %p59 = por %p57, %p58
      %p60 = scmp.ne.s32.totalorder %s52, %s54
      %p61 = scmp.eq.s32.totalorder %s23, 1
      %p62 = por %p60, %p61
      %p63 = scmp.ne.s32.totalorder %s54, %s55
      %p64 = scmp.eq.s32.totalorder %s23, 0
      %p65 = por %p63, %p64
      %p66 = scmp.ne.s32.totalorder %s54, %s55
      %p67 = scmp.eq.s32.totalorder %s24, 1
      %p68 = por %p66, %p67
      %p70 = scmp.ne.s32.totalorder %s55, %s69
      %p71 = scmp.eq.s32.totalorder %s24, 0
      %p72 = por %p70, %p71
      %s74 = sadd.s32 %s73, 1
      %p77 = scmp.eq.s32.totalorder %s18, 1
      %p78 = scmp.ne.s32.totalorder %s73, %s75
      %p79 = scmp.eq.s32.totalorder %s18, 0
      %p80 = por %p78, %p79
      %p81 = scmp.ne.s32.totalorder %s73, %s75
      %p82 = scmp.eq.s32.totalorder %s23, 1
      %p83 = por %p81, %p82
      %p84 = scmp.ne.s32.totalorder %s75, %s76
      %p85 = scmp.eq.s32.totalorder %s23, 0
      %p86 = por %p84, %p85
      %p87 = scmp.ne.s32.totalorder %s75, %s76
      %p88 = scmp.eq.s32.totalorder %s24, 1
      %p89 = por %p87, %p88
      %p91 = scmp.ne.s32.totalorder %s76, %s90
      %p92 = scmp.eq.s32.totalorder %s24, 0
      %p93 = por %p91, %p92
      %s95 = sadd.s32 %s94, 1
      %p98 = scmp.eq.s32.totalorder %s18, 1
      %p99 = scmp.ne.s32.totalorder %s94, %s96
      %p100 = scmp.eq.s32.totalorder %s18, 0
      %p101 = por %p99, %p100
      %p102 = scmp.ne.s32.totalorder %s94, %s96
      %p103 = scmp.eq.s32.totalorder %s23, 1
      %p104 = por %p102, %p103
      %p105 = scmp.ne.s32.totalorder %s96, %s97
      %p106 = scmp.eq.s32.totalorder %s23, 0
      %p107 = por %p105, %p106
      %p108 = scmp.ne.s32.totalorder %s96, %s97
      %p109 = scmp.eq.s32.totalorder %s24, 1
      %p110 = por %p108, %p109
      %p112 = scmp.ne.s32.totalorder %s97, %s111
      %p113 = scmp.eq.s32.totalorder %s24, 0
      %p114 = por %p112, %p113
      %s116 = sadd.s32 %s115, 1
      %p119 = scmp.eq.s32.totalorder %s18, 1
      %p120 = scmp.ne.s32.totalorder %s115, %s117
      %p121 = scmp.eq.s32.totalorder %s18, 0
      %p122 = por %p120, %p121
      %p123 = scmp.ne.s32.totalorder %s115, %s117
      %p124 = scmp.eq.s32.totalorder %s23, 1
      %p125 = por %p123, %p124
      %p126 = scmp.ne.s32.totalorder %s117, %s118
      %p127 = scmp.eq.s32.totalorder %s23, 0
      %p128 = por %p126, %p127
      %p129 = scmp.ne.s32.totalorder %s117, %s118
      %p130 = scmp.eq.s32.totalorder %s24, 1
      %p131 = por %p129, %p130
      %p133 = scmp.ne.s32.totalorder %s118, %s132
      %p134 = scmp.eq.s32.totalorder %s24, 0
      %p135 = por %p133, %p134
      %s137 = sadd.s32 %s136, 1
      %p140 = scmp.eq.s32.totalorder %s18, 1
      %p141 = scmp.ne.s32.totalorder %s136, %s138
      %p142 = scmp.eq.s32.totalorder %s18, 0
      %p143 = por %p141, %p142
      %p144 = scmp.ne.s32.totalorder %s136, %s138
      %p145 = scmp.eq.s32.totalorder %s23, 1
      %p146 = por %p144, %p145
      %p147 = scmp.ne.s32.totalorder %s138, %s139
      %p148 = scmp.eq.s32.totalorder %s23, 0
      %p149 = por %p147, %p148
      %p150 = scmp.ne.s32.totalorder %s138, %s139
      %p151 = scmp.eq.s32.totalorder %s24, 1
      %p152 = por %p150, %p151
      %p154 = scmp.ne.s32.totalorder %s139, %s153
      %p155 = scmp.eq.s32.totalorder %s24, 0
      %p156 = por %p154, %p155
      %s158 = sadd.s32 %s157, 1
      %p161 = scmp.eq.s32.totalorder %s18, 1
      %p162 = scmp.ne.s32.totalorder %s157, %s159
      %p163 = scmp.eq.s32.totalorder %s18, 0
      %p164 = por %p162, %p163
      %p165 = scmp.ne.s32.totalorder %s157, %s159
      %p166 = scmp.eq.s32.totalorder %s23, 1
      %p167 = por %p165, %p166
      %p168 = scmp.ne.s32.totalorder %s159, %s160
      %p169 = scmp.eq.s32.totalorder %s23, 0
      %p170 = por %p168, %p169
      %p171 = scmp.ne.s32.totalorder %s159, %s160
      %p172 = scmp.eq.s32.totalorder %s24, 1
      %p173 = por %p171, %p172
      %p175 = scmp.ne.s32.totalorder %s160, %s174
      %p176 = scmp.eq.s32.totalorder %s24, 0
      %p177 = por %p175, %p176
      %s179 = sadd.s32 %s178, 1
      %p182 = scmp.eq.s32.totalorder %s18, 1
      %p183 = scmp.ne.s32.totalorder %s178, %s180
      %p184 = scmp.eq.s32.totalorder %s18, 0
      %p185 = por %p183, %p184
      %p186 = scmp.ne.s32.totalorder %s178, %s180
      %p187 = scmp.eq.s32.totalorder %s23, 1
      %p188 = por %p186, %p187
      %p189 = scmp.ne.s32.totalorder %s180, %s181
      %p190 = scmp.eq.s32.totalorder %s23, 0
      %p191 = por %p189, %p190
      %p192 = scmp.ne.s32.totalorder %s180, %s181
      %p193 = scmp.eq.s32.totalorder %s24, 1
      %p194 = por %p192, %p193
      %p196 = scmp.ne.s32.totalorder %s181, %s195
      %p197 = scmp.eq.s32.totalorder %s24, 0
      %p198 = por %p196, %p197
      %s200 = sadd.s32 %s199, 1
      %p203 = scmp.eq.s32.totalorder %s18, 1
      %p204 = scmp.ne.s32.totalorder %s199, %s201
      %p205 = scmp.eq.s32.totalorder %s18, 0
      %p206 = por %p204, %p205
      %p207 = scmp.ne.s32.totalorder %s199, %s201
      %p208 = scmp.eq.s32.totalorder %s23, 1
      %p209 = por %p207, %p208
      %p210 = scmp.ne.s32.totalorder %s201, %s202
      %p211 = scmp.eq.s32.totalorder %s23, 0
      %p212 = por %p210, %p211
      %p213 = scmp.ne.s32.totalorder %s201, %s202
      %p214 = scmp.eq.s32.totalorder %s24, 1
      %p215 = por %p213, %p214
      %p217 = scmp.ne.s32.totalorder %s202, %s216
      %p218 = scmp.eq.s32.totalorder %s24, 0
      %p219 = por %p217, %p218
      %s220 = ssub.s32 %s18, %s25
      %p221 = scmp.eq.s32.totalorder %s220, 0
      %s223 = sadd.s32 %s222, 1
      %s224 = scalar_select %p221, %s222, %s223
      %p227 = pneg %p221
      %p228 = scmp.eq.s32.totalorder %s18, 1
      %p229 = por %p227, %p228
      %p230 = scmp.ne.s32.totalorder %s222, %s225
      %p231 = scmp.eq.s32.totalorder %s18, 0
      %p232 = por %p230, %p231
      %p233 = scmp.ne.s32.totalorder %s222, %s225
      %p234 = scmp.eq.s32.totalorder %s23, 1
      %p235 = por %p233, %p234
      %p236 = scmp.ne.s32.totalorder %s225, %s226
      %p237 = scmp.eq.s32.totalorder %s23, 0
      %p238 = por %p236, %p237
      %p239 = scmp.ne.s32.totalorder %s225, %s226
      %p240 = scmp.eq.s32.totalorder %s24, 1
      %p241 = por %p239, %p240
      %p243 = scmp.ne.s32.totalorder %s226, %s242
      %p244 = scmp.eq.s32.totalorder %s24, 0
      %p245 = por %p243, %p244
      %p246 = scmp.le.s32.totalorder 1, %s18
      %p247 = scmp.lt.s32.totalorder %s18, 3
      %p248 = pnand %p246, %p247
      %p249 = pneg %p248
      // Predicated region
      $region9: #{tpu_custom_call.1} parent=5 // pred_check
        _
      $region10: #{tpu_custom_call.1} parent=5 // pred_check_branch
        %251 = sbr.rel (%p248) target = $region12
      $region11: #{tpu_custom_call.1} parent=5 // pred_region
        %s252 = ssub.s32 %s18, 1
        // Predicated region
        $region13: #{tpu_custom_call.1} parent=11 // pred_check
          %p253 = pneg %p65
        $region14: #{tpu_custom_call.1} parent=11 // pred_check_branch
          %255 = sbr.rel (%p253) target = $region16
        $region15: #{tpu_custom_call.1} parent=11 // pred_region
          _
        $region16: #{tpu_custom_call.1} parent=11 // pred_fallthru
          _
        // Predicated region
        $region17: #{tpu_custom_call.1} parent=11 // pred_check
          %p256 = pneg %p86
        $region18: #{tpu_custom_call.1} parent=11 // pred_check_branch
          %258 = sbr.rel (%p256) target = $region20
        $region19: #{tpu_custom_call.1} parent=11 // pred_region
          _
        $region20: #{tpu_custom_call.1} parent=11 // pred_fallthru
          _
        // Predicated region
        $region21: #{tpu_custom_call.1} parent=11 // pred_check
          %p259 = pneg %p107
        $region22: #{tpu_custom_call.1} parent=11 // pred_check_branch
          %261 = sbr.rel (%p259) target = $region24
        $region23: #{tpu_custom_call.1} parent=11 // pred_region
          _
        $region24: #{tpu_custom_call.1} parent=11 // pred_fallthru
          _
        // Predicated region
        $region25: #{tpu_custom_call.1} parent=11 // pred_check
          %p262 = pneg %p128
        $region26: #{tpu_custom_call.1} parent=11 // pred_check_branch
          %264 = sbr.rel (%p262) target = $region28
        $region27: #{tpu_custom_call.1} parent=11 // pred_region
          _
        $region28: #{tpu_custom_call.1} parent=11 // pred_fallthru
          _
        // Predicated region
        $region29: #{tpu_custom_call.1} parent=11 // pred_check
          %p265 = pneg %p149
        $region30: #{tpu_custom_call.1} parent=11 // pred_check_branch
          %267 = sbr.rel (%p265) target = $region32
        $region31: #{tpu_custom_call.1} parent=11 // pred_region
          _
        $region32: #{tpu_custom_call.1} parent=11 // pred_fallthru
          _
        // Predicated region
        $region33: #{tpu_custom_call.1} parent=11 // pred_check
          %p268 = pneg %p170
        $region34: #{tpu_custom_call.1} parent=11 // pred_check_branch
          %270 = sbr.rel (%p268) target = $region36
        $region35: #{tpu_custom_call.1} parent=11 // pred_region
          _
        $region36: #{tpu_custom_call.1} parent=11 // pred_fallthru
          _
        // Predicated region
        $region37: #{tpu_custom_call.1} parent=11 // pred_check
          %p271 = pneg %p191
        $region38: #{tpu_custom_call.1} parent=11 // pred_check_branch
          %273 = sbr.rel (%p271) target = $region40
        $region39: #{tpu_custom_call.1} parent=11 // pred_region
          _
        $region40: #{tpu_custom_call.1} parent=11 // pred_fallthru
          _
        // Predicated region
        $region41: #{tpu_custom_call.1} parent=11 // pred_check
          %p274 = pneg %p212
        $region42: #{tpu_custom_call.1} parent=11 // pred_check_branch
          %276 = sbr.rel (%p274) target = $region44
        $region43: #{tpu_custom_call.1} parent=11 // pred_region
          _
        $region44: #{tpu_custom_call.1} parent=11 // pred_fallthru
          _
      $region12: #{tpu_custom_call.1} parent=5 // pred_fallthru
        _
      %p277 = scmp.lt.s32.totalorder %s18, 2
      // Predicated region
      $region45: #{tpu_custom_call.1} parent=5 // pred_check
        %p278 = pneg %p277
      $region46: #{tpu_custom_call.1} parent=5 // pred_check_branch
        %280 = sbr.rel (%p278) target = $region48
      $region47: #{tpu_custom_call.1} parent=5 // pred_region
        // Predicated region
        $region49: #{tpu_custom_call.1} parent=47 // pred_check
          %p281 = pneg %p38
        $region50: #{tpu_custom_call.1} parent=47 // pred_check_branch
          %283 = sbr.rel (%p281) target = $region52
        $region51: #{tpu_custom_call.1} parent=47 // pred_region
          %p284 = scmp.lt.s32.totalorder %s18, 1
          %s285 = scalar_select %p284, %s18, 1
          %s286 = smul.addr %s285, 8
          %s287 = smul.addr %s286, 4
          %s288 = scalar_lea.vmem %s0, %s287
        $region52: #{tpu_custom_call.1} parent=47 // pred_fallthru
          _
      $region48: #{tpu_custom_call.1} parent=5 // pred_fallthru
        _
      %p289 = scmp.le.s32.totalorder 1, %s18
      %p290 = scmp.lt.s32.totalorder %s18, 3
      %p291 = pnand %p289, %p290
      %p292 = pneg %p291
      // Predicated region
      $region53: #{tpu_custom_call.1} parent=5 // pred_check
        _
      $region54: #{tpu_custom_call.1} parent=5 // pred_check_branch
        %294 = sbr.rel (%p291) target = $region56
      $region55: #{tpu_custom_call.1} parent=5 // pred_region
        %s295 = ssub.s32 %s18, 1
        %p296 = scmp.lt.s32.totalorder %s23, 1
        %s297 = scalar_select %p296, %s23, 1
        %s298 = smul.addr %s297, 8
        %s299 = smul.addr %s298, 4
        %s300 = scalar_lea.vmem %s0, %s299
        %p301 = pneg %p44
        %p302 = pneg %p41
        %p303 = pneg %p65
        %p304 = pneg %p62
        %p305 = pneg %p86
        %p306 = pneg %p83
        %p307 = pneg %p107
        %p308 = pneg %p104
        %p309 = pneg %p128
        %p310 = pneg %p125
        %p311 = pneg %p149
        %p312 = pneg %p146
        %p313 = pneg %p170
        %p314 = pneg %p167
        %p315 = pneg %p191
        %p316 = pneg %p188
        %p317 = pneg %p212
        %p318 = pneg %p209
        %p319 = pneg %p238
        %p320 = pneg %p235
        %s321 = sand.u32 %s225, 1
        %s322 = scalar_lea.sflag [#allocation3], %s321
        %s323 = sand.u32 %s225, 1
        %s324 = smul.addr %s323, 64
        %s325 = scalar_lea.vmem [#allocation2], %s324
        %p326 = scmp.lt.s32.totalorder %s23, 1
        %s327 = scalar_select %p326, %s23, 1
        %s328 = smul.addr %s327, 8
        %s329 = smul.addr %s328, 4
        %s330 = scalar_lea.vmem %s0, %s329
        %v333 = vld [vmem:[%s1] sm:$0xf]
        %v334 = vld [vmem:[%s1 + $0x4] sm:$0xf]
        %v335 = vld [vmem:[%s1 + $0x8] sm:$0xf]
        %v336 = vld [vmem:[%s1 + $0xc] sm:$0xf]
        %v337 = vld [vmem:[%s2] sm:$0x1]
        %v338 = vld [vmem:[%s330] sm:$0xff]
        %v339 = vld [vmem:[%s330 + $0x8] sm:$0xff]
        %v340 = vld [vmem:[%s330 + $0x10] sm:$0xff]
        %v341 = vld [vmem:[%s330 + $0x18] sm:$0xff]
        %v346 = vunpack.c.l.b16 %v338
        %v347 = vunpack.c.h.b16 %v338
        %v348 = vunpack.c.l.b16 %v339
        %v349 = vunpack.c.h.b16 %v339
        %v350 = vunpack.c.l.b16 %v340
        %v351 = vunpack.c.h.b16 %v340
        %v352 = vunpack.c.l.b16 %v341
        %v353 = vunpack.c.h.b16 %v341
        %v354 = vpack.c.b16 %v348, %v346
        %v355 = vpack.c.b16 %v349, %v347
        %v356 = vpack.c.b16 %v352, %v350
        %v357 = vpack.c.b16 %v353, %v351
        %vm362 = vcmask 261120
        %v364 = vsel %vm362, %v337, 0
        %366 = vmatprep.subr.bf16.mxu0 0
        %367 = vmatpush1.bf16.msra.mxu0 0
        %368 = vmatprep.subr.bf16.mxu0 0
        %369 = vmatpush1.bf16.msra.mxu0 0
        %370 = vmatprep.subr.bf16.mxu0 0
        %371 = vmatpush1.bf16.msra.mxu0 0
        %372 = vmatprep.subr.bf16.mxu0 0
        %373 = vmatpush1.bf16.msra.mxu0 0
        %374 = vmatprep.subr.bf16.mxu0 0
        %375 = vmatpush1.bf16.msra.mxu0 0
        %376 = vmatprep.subr.bf16.mxu0 0
        %377 = vmatpush1.bf16.msra.mxu0 0
        %378 = vmatprep.subr.bf16.mxu0 %v357
        %379 = vmatpush1.bf16.msra.mxu0 %v356
        %380 = vmatprep.subr.bf16.mxu0 %v355
        %381 = vmatpush1.bf16.msra.mxu0 %v354
        %382 = vmatprep.subr.bf16.mxu0 0
        %383 = vmatpush2.bf16.msra.mxu0 0
        %384 = vmatprep.subr.bf16.mxu0 0
        %385 = vmatpush2.bf16.msra.mxu0 0
        %386 = vmatprep.subr.bf16.mxu0 0
        %387 = vmatpush2.bf16.msra.mxu0 0
        %388 = vmatprep.subr.bf16.mxu0 0
        %389 = vmatpush2.bf16.msra.mxu0 0
        %390 = vmatprep.subr.bf16.mxu0 0
        %391 = vmatpush2.bf16.msra.mxu0 0
        %392 = vmatprep.subr.bf16.mxu0 0
        %393 = vmatpush2.bf16.msra.mxu0 0
        %394 = vmatprep.subr.bf16.mxu0 0
        %395 = vmatpush2.bf16.msra.mxu0 0
        %396 = vmatprep.subr.bf16.mxu0 0
        %397 = vmatpush2.bf16.msra.mxu0 0
        %398 = vmatprep.mubr.bf16.mxu0 0
        %399 = vmatmul.mubr.bf16.gmra.mxu0 %v364
        %v400 = vpop.f32.mrf.mxu0
        %v401 = vadd.f32 0.0, %v400
        %v402 = vpop.f32.mrf.mxu0
        %v403 = vadd.f32 0.0, %v402
        %v404 = vpop.f32.mrf.mxu0
        %v405 = vpop.f32.mrf.mxu0
        %406 = vdwg.mxu0
        %v407 = vld [vmem:[%s3] sm:$0xff]
        %v408 = vld [vmem:[%s3 + $0x8] sm:$0xff]
        %v409 = vld [vmem:[%s3 + $0x10] sm:$0xff]
        %v410 = vld [vmem:[%s3 + $0x18] sm:$0xff]
        %v411 = vld [vmem:[%s4] sm:$0xff]
        %v412 = vld [vmem:[%s4 + $0x8] sm:$0xff]
        %v413 = vld [vmem:[%s4 + $0x10] sm:$0xff]
        %v414 = vld [vmem:[%s4 + $0x18] sm:$0xff]
        loop: start=0, step=1, limit=2
        $region57: #{tpu_custom_call.1} parent=55 // loop_pre_header
          _
        $region58: #{tpu_custom_call.1} parent=55 // loop_header
          %s416 = sphi 0, %s420
          %p417 = scmp.ge.s32.totalorder %s416, 2
          %v421 = vphi 0.0, %v1026
          %v422 = vphi 0.0, %v1027
          %v423 = vphi 0.0, %v1028
          %v424 = vphi 0.0, %v1029
        $region59: #{tpu_custom_call.1} parent=55 // loop_header_branch
          %419 = sbr.rel (%p417) target = $region63
        $region60: #{tpu_custom_call.1} parent=55 // loop_body
          %s425 = smul.u32 %s416, 128
          %s426 = sshra.s32 %s425, 7
          %s427 = sand.u32 %s425, 127
          %s428 = smul.addr %s426, 4
          %s429 = scalar_lea.vmem %s330, %s428
          %v430 = vld [vmem:[%s429] sm:$0xf]
          %v431 = vld [vmem:[%s429 + $0x8] sm:$0xf]
          %v432 = vld [vmem:[%s429 + $0x10] sm:$0xf]
          %v433 = vld [vmem:[%s429 + $0x18] sm:$0xf]
          %v438 = vunpack.c.l.b16 %v333
          %v439 = vunpack.c.l.b16 %v334
          %v440 = vunpack.c.l.b16 %v335
          %v441 = vunpack.c.l.b16 %v336
          %v442 = vpack.c.b16 %v439, %v438
          %v443 = vpack.c.b16 %v441, %v440
          %v448 = vunpack.c.l.b16 %v430
          %v449 = vunpack.c.l.b16 %v431
          %v450 = vunpack.c.l.b16 %v432
          %v451 = vunpack.c.l.b16 %v433
          %v452 = vpack.c.b16 %v449, %v448
          %v453 = vpack.c.b16 %v451, %v450
          %v457 = vsel %vm362, %v442, 0
          %v460 = vsel %vm362, %v443, 0
          %462 = vmatprep.subr.bf16.mxu0 0
          %463 = vmatpush1.bf16.msra.mxu0 0
          %464 = vmatprep.subr.bf16.mxu0 0
          %465 = vmatpush1.bf16.msra.mxu0 0
          %466 = vmatprep.subr.bf16.mxu0 0
          %467 = vmatpush1.bf16.msra.mxu0 0
          %468 = vmatprep.subr.bf16.mxu0 0
          %469 = vmatpush1.bf16.msra.mxu0 0
          %470 = vmatprep.subr.bf16.mxu0 0
          %471 = vmatpush1.bf16.msra.mxu0 0
          %472 = vmatprep.subr.bf16.mxu0 0
          %473 = vmatpush1.bf16.msra.mxu0 0
          %474 = vmatprep.subr.bf16.mxu0 0
          %475 = vmatpush1.bf16.msra.mxu0 %v453
          %476 = vmatprep.subr.bf16.mxu0 0
          %477 = vmatpush1.bf16.msra.mxu0 %v452
          %478 = vmatprep.subr.bf16.mxu0 0
          %479 = vmatpush2.bf16.msra.mxu0 0
          %480 = vmatprep.subr.bf16.mxu0 0
          %481 = vmatpush2.bf16.msra.mxu0 0
          %482 = vmatprep.subr.bf16.mxu0 0
          %483 = vmatpush2.bf16.msra.mxu0 0
          %484 = vmatprep.subr.bf16.mxu0 0
          %485 = vmatpush2.bf16.msra.mxu0 0
          %486 = vmatprep.subr.bf16.mxu0 0
          %487 = vmatpush2.bf16.msra.mxu0 0
          %488 = vmatprep.subr.bf16.mxu0 0
          %489 = vmatpush2.bf16.msra.mxu0 0
          %490 = vmatprep.subr.bf16.mxu0 0
          %491 = vmatpush2.bf16.msra.mxu0 0
          %492 = vmatprep.subr.bf16.mxu0 0
          %493 = vmatpush2.bf16.msra.mxu0 0
          %494 = vmatprep.mubr.bf16.mxu0 0
          %495 = vmatmul.mubr.bf16.gmra.mxu0 %v457
          %v496 = vpop.f32.mrf.mxu0
          %v497 = vadd.f32 0.0, %v496
          %v498 = vpop.f32.mrf.mxu0
          %v499 = vpop.f32.mrf.mxu0
          %v500 = vadd.f32 0.0, %v499
          %v501 = vpop.f32.mrf.mxu0
          %502 = vmatprep.mubr.bf16.mxu0 0
          %503 = vmatmul.mubr.bf16.gmra.mxu0 %v460
          %v504 = vpop.f32.mrf.mxu0
          %v505 = vadd.f32 0.0, %v504
          %v506 = vpop.f32.mrf.mxu0
          %v507 = vpop.f32.mrf.mxu0
          %v508 = vadd.f32 0.0, %v507
          %v509 = vpop.f32.mrf.mxu0
          %510 = vdwg.mxu0
          %v511 = vpack.c.bf16 %v500, %v497
          %v512 = vpack.c.bf16 %v508, %v505
          %v513 = vld [vmem:[%s330] sm:$0xff]
          %v514 = vld [vmem:[%s330 + $0x8] sm:$0xff]
          %v515 = vld [vmem:[%s330 + $0x10] sm:$0xff]
          %v516 = vld [vmem:[%s330 + $0x18] sm:$0xff]
          %v517 = vlaneseq
          %v518 = vshrl.u32 %v517, 7
          %v519 = vsub.s32 0, %v518
          %v520 = vrot.slane %v401, %v519
          %v521 = vlaneseq
          %v522 = vshrl.u32 %v521, 7
          %v523 = vsub.s32 0, %v522
          %v524 = vrot.slane %v403, %v523
          %525 = vxpose.xlu0.c.b16.start [1/8] %v511, 128
          %526 = vxpose.xlu0.c.b16.cont [2/8] %v512, 128
          %527 = vxpose.xlu0.c.b16.cont [3/8] 0, 128
          %528 = vxpose.xlu0.c.b16.cont [4/8] 0, 128
          %529 = vxpose.xlu0.c.b16.cont [5/8] 0, 128
          %530 = vxpose.xlu0.c.b16.cont [6/8] 0, 128
          %531 = vxpose.xlu0.c.b16.cont [7/8] 0, 128
          %532 = vxpose.xlu0.c.b16.end [8/8] 0, 128
          %v533 = vpop.trf.xlu0
          %v534 = vpop.trf.xlu0
          %v535 = vpop.trf.xlu0
          %v536 = vpop.trf.xlu0
          %v537 = vpop.trf.xlu0
          %v538 = vpop.trf.xlu0
          %v539 = vpop.trf.xlu0
          %v540 = vpop.trf.xlu0
          %v545 = vunpack.c.l.b16 %v513
          %v546 = vunpack.c.h.b16 %v513
          %v547 = vunpack.c.l.b16 %v514
          %v548 = vunpack.c.h.b16 %v514
          %v549 = vunpack.c.l.b16 %v515
          %v550 = vunpack.c.h.b16 %v515
          %v551 = vunpack.c.l.b16 %v516
          %v552 = vunpack.c.h.b16 %v516
          %v553 = vpack.c.b16 %v547, %v545
          %v554 = vpack.c.b16 %v548, %v546
          %v555 = vpack.c.b16 %v551, %v549
          %v556 = vpack.c.b16 %v552, %v550
          %v562 = vsel %vm362, %v533, 0
          %v565 = vsel %vm362, %v534, 0
          %v568 = vsel %vm362, %v535, 0
          %v571 = vsel %vm362, %v536, 0
          %v574 = vsel %vm362, %v537, 0
          %v577 = vsel %vm362, %v538, 0
          %v580 = vsel %vm362, %v539, 0
          %v583 = vsel %vm362, %v540, 0
          %585 = vmatprep.subr.bf16.mxu0 0
          %586 = vmatpush1.bf16.msra.mxu0 0
          %587 = vmatprep.subr.bf16.mxu0 0
          %588 = vmatpush1.bf16.msra.mxu0 0
          %589 = vmatprep.subr.bf16.mxu0 0
          %590 = vmatpush1.bf16.msra.mxu0 0
          %591 = vmatprep.subr.bf16.mxu0 0
          %592 = vmatpush1.bf16.msra.mxu0 0
          %593 = vmatprep.subr.bf16.mxu0 0
          %594 = vmatpush1.bf16.msra.mxu0 0
          %595 = vmatprep.subr.bf16.mxu0 0
          %596 = vmatpush1.bf16.msra.mxu0 0
          %597 = vmatprep.subr.bf16.mxu0 %v556
          %598 = vmatpush1.bf16.msra.mxu0 %v555
          %599 = vmatprep.subr.bf16.mxu0 %v554
          %600 = vmatpush1.bf16.msra.mxu0 %v553
          %601 = vmatprep.subr.bf16.mxu0 0
          %602 = vmatpush2.bf16.msra.mxu0 0
          %603 = vmatprep.subr.bf16.mxu0 0
          %604 = vmatpush2.bf16.msra.mxu0 0
          %605 = vmatprep.subr.bf16.mxu0 0
          %606 = vmatpush2.bf16.msra.mxu0 0
          %607 = vmatprep.subr.bf16.mxu0 0
          %608 = vmatpush2.bf16.msra.mxu0 0
          %609 = vmatprep.subr.bf16.mxu0 0
          %610 = vmatpush2.bf16.msra.mxu0 0
          %611 = vmatprep.subr.bf16.mxu0 0
          %612 = vmatpush2.bf16.msra.mxu0 0
          %613 = vmatprep.subr.bf16.mxu0 0
          %614 = vmatpush2.bf16.msra.mxu0 0
          %615 = vmatprep.subr.bf16.mxu0 0
          %616 = vmatpush2.bf16.msra.mxu0 0
          %617 = vmatprep.mubr.bf16.mxu0 0
          %618 = vmatmul.mubr.bf16.gmra.mxu0 %v562
          %v619 = vpop.f32.mrf.mxu0
          %v620 = vadd.f32 %v520, %v619
          %v621 = vpop.f32.mrf.mxu0
          %v622 = vadd.f32 %v524, %v621
          %v623 = vpop.f32.mrf.mxu0
          %v624 = vadd.f32 %v520, %v623
          %v625 = vpop.f32.mrf.mxu0
          %v626 = vadd.f32 %v524, %v625
          %627 = vmatprep.mubr.bf16.mxu0 0
          %628 = vmatmul.mubr.bf16.gmra.mxu0 %v565
          %v629 = vpop.f32.mrf.mxu0
          %v630 = vadd.f32 %v520, %v629
          %v631 = vpop.f32.mrf.mxu0
          %v632 = vadd.f32 %v524, %v631
          %v633 = vpop.f32.mrf.mxu0
          %v634 = vadd.f32 %v520, %v633
          %v635 = vpop.f32.mrf.mxu0
          %v636 = vadd.f32 %v524, %v635
          %637 = vmatprep.mubr.bf16.mxu0 0
          %638 = vmatmul.mubr.bf16.gmra.mxu0 %v568
          %v639 = vpop.f32.mrf.mxu0
          %v640 = vadd.f32 %v520, %v639
          %v641 = vpop.f32.mrf.mxu0
          %v642 = vadd.f32 %v524, %v641
          %v643 = vpop.f32.mrf.mxu0
          %v644 = vadd.f32 %v520, %v643
          %v645 = vpop.f32.mrf.mxu0
          %v646 = vadd.f32 %v524, %v645
          %647 = vmatprep.mubr.bf16.mxu0 0
          %648 = vmatmul.mubr.bf16.gmra.mxu0 %v571
          %v649 = vpop.f32.mrf.mxu0
          %v650 = vadd.f32 %v520, %v649
          %v651 = vpop.f32.mrf.mxu0
          %v652 = vadd.f32 %v524, %v651
          %v653 = vpop.f32.mrf.mxu0
          %v654 = vadd.f32 %v520, %v653
          %v655 = vpop.f32.mrf.mxu0
          %v656 = vadd.f32 %v524, %v655
          %657 = vmatprep.mubr.bf16.mxu0 0
          %658 = vmatmul.mubr.bf16.gmra.mxu0 %v574
          %v659 = vpop.f32.mrf.mxu0
          %v660 = vadd.f32 %v520, %v659
          %v661 = vpop.f32.mrf.mxu0
          %v662 = vadd.f32 %v524, %v661
          %v663 = vpop.f32.mrf.mxu0
          %v664 = vadd.f32 %v520, %v663
          %v665 = vpop.f32.mrf.mxu0
          %v666 = vadd.f32 %v524, %v665
          %667 = vmatprep.mubr.bf16.mxu0 0
          %668 = vmatmul.mubr.bf16.gmra.mxu0 %v577
          %v669 = vpop.f32.mrf.mxu0
          %v670 = vadd.f32 %v520, %v669
          %v671 = vpop.f32.mrf.mxu0
          %v672 = vadd.f32 %v524, %v671
          %v673 = vpop.f32.mrf.mxu0
          %v674 = vadd.f32 %v520, %v673
          %v675 = vpop.f32.mrf.mxu0
          %v676 = vadd.f32 %v524, %v675
          %677 = vmatprep.mubr.bf16.mxu0 0
          %678 = vmatmul.mubr.bf16.gmra.mxu0 %v580
          %v679 = vpop.f32.mrf.mxu0
          %v680 = vadd.f32 %v520, %v679
          %v681 = vpop.f32.mrf.mxu0
          %v682 = vadd.f32 %v524, %v681
          %v683 = vpop.f32.mrf.mxu0
          %v684 = vadd.f32 %v520, %v683
          %v685 = vpop.f32.mrf.mxu0
          %v686 = vadd.f32 %v524, %v685
          %687 = vmatprep.mubr.bf16.mxu0 0
          %688 = vmatmul.mubr.bf16.gmra.mxu0 %v583
          %v689 = vpop.f32.mrf.mxu0
          %v690 = vadd.f32 %v520, %v689
          %v691 = vpop.f32.mrf.mxu0
          %v692 = vadd.f32 %v524, %v691
          %v693 = vpop.f32.mrf.mxu0
          %v694 = vadd.f32 %v520, %v693
          %v695 = vpop.f32.mrf.mxu0
          %v696 = vadd.f32 %v524, %v695
          %697 = vdwg.mxu0
          %v698 = vmax.f32 %v620, %v622
          %699 = vmax.xlane.f32.xlu0 %v698
          %v700 = vpop.xlane.xlu0 %699
          %v701 = vmax.f32 %v624, %v626
          %702 = vmax.xlane.f32.xlu0 %v701
          %v703 = vpop.xlane.xlu0 %702
          %v704 = vmax.f32 %v630, %v632
          %705 = vmax.xlane.f32.xlu0 %v704
          %v706 = vpop.xlane.xlu0 %705
          %v707 = vmax.f32 %v634, %v636
          %708 = vmax.xlane.f32.xlu0 %v707
          %v709 = vpop.xlane.xlu0 %708
          %v710 = vmax.f32 %v640, %v642
          %711 = vmax.xlane.f32.xlu0 %v710
          %v712 = vpop.xlane.xlu0 %711
          %v713 = vmax.f32 %v644, %v646
          %714 = vmax.xlane.f32.xlu0 %v713
          %v715 = vpop.xlane.xlu0 %714
          %v716 = vmax.f32 %v650, %v652
          %717 = vmax.xlane.f32.xlu0 %v716
          %v718 = vpop.xlane.xlu0 %717
          %v719 = vmax.f32 %v654, %v656
          %720 = vmax.xlane.f32.xlu0 %v719
          %v721 = vpop.xlane.xlu0 %720
          %v722 = vmax.f32 %v660, %v662
          %723 = vmax.xlane.f32.xlu0 %v722
          %v724 = vpop.xlane.xlu0 %723
          %v725 = vmax.f32 %v664, %v666
          %726 = vmax.xlane.f32.xlu0 %v725
          %v727 = vpop.xlane.xlu0 %726
          %v728 = vmax.f32 %v670, %v672
          %729 = vmax.xlane.f32.xlu0 %v728
          %v730 = vpop.xlane.xlu0 %729
          %v731 = vmax.f32 %v674, %v676
          %732 = vmax.xlane.f32.xlu0 %v731
          %v733 = vpop.xlane.xlu0 %732
          %v734 = vmax.f32 %v680, %v682
          %735 = vmax.xlane.f32.xlu0 %v734
          %v736 = vpop.xlane.xlu0 %735
          %v737 = vmax.f32 %v684, %v686
          %738 = vmax.xlane.f32.xlu0 %v737
          %v739 = vpop.xlane.xlu0 %738
          %v740 = vmax.f32 %v690, %v692
          %741 = vmax.xlane.f32.xlu0 %v740
          %v742 = vpop.xlane.xlu0 %741
          %v743 = vmax.f32 %v694, %v696
          %744 = vmax.xlane.f32.xlu0 %v743
          %v745 = vpop.xlane.xlu0 %744
          %v746 = vsub.f32 %v620, %v700
          %v747 = vsub.f32 %v622, %v700
          %v748 = vsub.f32 %v624, %v703
          %v749 = vsub.f32 %v626, %v703
          %v750 = vsub.f32 %v630, %v706
          %v751 = vsub.f32 %v632, %v706
          %v752 = vsub.f32 %v634, %v709
          %v753 = vsub.f32 %v636, %v709
          %v754 = vsub.f32 %v640, %v712
          %v755 = vsub.f32 %v642, %v712
          %v756 = vsub.f32 %v644, %v715
          %v757 = vsub.f32 %v646, %v715
          %v758 = vsub.f32 %v650, %v718
          %v759 = vsub.f32 %v652, %v718
          %v760 = vsub.f32 %v654, %v721
          %v761 = vsub.f32 %v656, %v721
          %v762 = vsub.f32 %v660, %v724
          %v763 = vsub.f32 %v662, %v724
          %v764 = vsub.f32 %v664, %v727
          %v765 = vsub.f32 %v666, %v727
          %v766 = vsub.f32 %v670, %v730
          %v767 = vsub.f32 %v672, %v730
          %v768 = vsub.f32 %v674, %v733
          %v769 = vsub.f32 %v676, %v733
          %v770 = vsub.f32 %v680, %v736
          %v771 = vsub.f32 %v682, %v736
          %v772 = vsub.f32 %v684, %v739
          %v773 = vsub.f32 %v686, %v739
          %v774 = vsub.f32 %v690, %v742
          %v775 = vsub.f32 %v692, %v742
          %v776 = vsub.f32 %v694, %v745
          %v777 = vsub.f32 %v696, %v745
          %v778 = vmul.f32 %v746, 1.442695
          %v779 = vpow.pop %v778
          %v780 = vmul.f32 %v747, 1.442695
          %v781 = vpow.pop %v780
          %v782 = vmul.f32 %v748, 1.442695
          %v783 = vpow.pop %v782
          %v784 = vmul.f32 %v749, 1.442695
          %v785 = vpow.pop %v784
          %v786 = vmul.f32 %v750, 1.442695
          %v787 = vpow.pop %v786
          %v788 = vmul.f32 %v751, 1.442695
          %v789 = vpow.pop %v788
          %v790 = vmul.f32 %v752, 1.442695
          %v791 = vpow.pop %v790
          %v792 = vmul.f32 %v753, 1.442695
          %v793 = vpow.pop %v792
          %v794 = vmul.f32 %v754, 1.442695
          %v795 = vpow.pop %v794
          %v796 = vmul.f32 %v755, 1.442695
          %v797 = vpow.pop %v796
          %v798 = vmul.f32 %v756, 1.442695
          %v799 = vpow.pop %v798
          %v800 = vmul.f32 %v757, 1.442695
          %v801 = vpow.pop %v800
          %v802 = vmul.f32 %v758, 1.442695
          %v803 = vpow.pop %v802
          %v804 = vmul.f32 %v759, 1.442695
          %v805 = vpow.pop %v804
          %v806 = vmul.f32 %v760, 1.442695
          %v807 = vpow.pop %v806
          %v808 = vmul.f32 %v761, 1.442695
          %v809 = vpow.pop %v808
          %v810 = vmul.f32 %v762, 1.442695
          %v811 = vpow.pop %v810
          %v812 = vmul.f32 %v763, 1.442695
          %v813 = vpow.pop %v812
          %v814 = vmul.f32 %v764, 1.442695
          %v815 = vpow.pop %v814
          %v816 = vmul.f32 %v765, 1.442695
          %v817 = vpow.pop %v816
          %v818 = vmul.f32 %v766, 1.442695
          %v819 = vpow.pop %v818
          %v820 = vmul.f32 %v767, 1.442695
          %v821 = vpow.pop %v820
          %v822 = vmul.f32 %v768, 1.442695
          %v823 = vpow.pop %v822
          %v824 = vmul.f32 %v769, 1.442695
          %v825 = vpow.pop %v824
          %v826 = vmul.f32 %v770, 1.442695
          %v827 = vpow.pop %v826
          %v828 = vmul.f32 %v771, 1.442695
          %v829 = vpow.pop %v828
          %v830 = vmul.f32 %v772, 1.442695
          %v831 = vpow.pop %v830
          %v832 = vmul.f32 %v773, 1.442695
          %v833 = vpow.pop %v832
          %v834 = vmul.f32 %v774, 1.442695
          %v835 = vpow.pop %v834
          %v836 = vmul.f32 %v775, 1.442695
          %v837 = vpow.pop %v836
          %v838 = vmul.f32 %v776, 1.442695
          %v839 = vpow.pop %v838
          %v840 = vmul.f32 %v777, 1.442695
          %v841 = vpow.pop %v840
          %v842 = vpack.c.bf16 %v783, %v779
          %v843 = vpack.c.bf16 %v785, %v781
          %v844 = vpack.c.bf16 %v791, %v787
          %v845 = vpack.c.bf16 %v793, %v789
          %v846 = vpack.c.bf16 %v799, %v795
          %v847 = vpack.c.bf16 %v801, %v797
          %v848 = vpack.c.bf16 %v807, %v803
          %v849 = vpack.c.bf16 %v809, %v805
          %v850 = vpack.c.bf16 %v815, %v811
          %v851 = vpack.c.bf16 %v817, %v813
          %v852 = vpack.c.bf16 %v823, %v819
          %v853 = vpack.c.bf16 %v825, %v821
          %v854 = vpack.c.bf16 %v831, %v827
          %v855 = vpack.c.bf16 %v833, %v829
          %v856 = vpack.c.bf16 %v839, %v835
          %v857 = vpack.c.bf16 %v841, %v837
          %858 = vmatprep.subr.bf16.mxu0 %v857
          %859 = vmatpush1.bf16.xpose.msra.mxu0 %v856
          %860 = vmatprep.subr.bf16.mxu0 %v855
          %861 = vmatpush1.bf16.xpose.msra.mxu0 %v854
          %862 = vmatprep.subr.bf16.mxu0 %v853
          %863 = vmatpush1.bf16.xpose.msra.mxu0 %v852
          %864 = vmatprep.subr.bf16.mxu0 %v851
          %865 = vmatpush1.bf16.xpose.msra.mxu0 %v850
          %866 = vmatprep.subr.bf16.mxu0 %v849
          %867 = vmatpush1.bf16.xpose.msra.mxu0 %v848
          %868 = vmatprep.subr.bf16.mxu0 %v847
          %869 = vmatpush1.bf16.xpose.msra.mxu0 %v846
          %870 = vmatprep.subr.bf16.mxu0 %v845
          %871 = vmatpush1.bf16.xpose.msra.mxu0 %v844
          %872 = vmatprep.subr.bf16.mxu0 %v843
          %873 = vmatpush1.bf16.xpose.msra.mxu0 %v842
          %874 = vmatprep.subr.bf16.mxu0 0
          %875 = vmatpush2.bf16.xpose.msra.mxu0 0
          %876 = vmatprep.subr.bf16.mxu0 0
          %877 = vmatpush2.bf16.xpose.msra.mxu0 0
          %878 = vmatprep.subr.bf16.mxu0 0
          %879 = vmatpush2.bf16.xpose.msra.mxu0 0
          %880 = vmatprep.subr.bf16.mxu0 0
          %881 = vmatpush2.bf16.xpose.msra.mxu0 0
          %882 = vmatprep.subr.bf16.mxu0 0
          %883 = vmatpush2.bf16.xpose.msra.mxu0 0
          %884 = vmatprep.subr.bf16.mxu0 0
          %885 = vmatpush2.bf16.xpose.msra.mxu0 0
          %886 = vmatprep.subr.bf16.mxu0 0
          %887 = vmatpush2.bf16.xpose.msra.mxu0 0
          %888 = vmatprep.subr.bf16.mxu0 0
          %889 = vmatpush2.bf16.xpose.msra.mxu0 0
          %890 = vmatprep.mubr.bf16.mxu0 %v554
          %891 = vmatmul.mubr.bf16.gmra.mxu0 %v553
          %v892 = vpop.f32.mrf.mxu0
          %v893 = vadd.f32 0.0, %v892
          %v894 = vpop.f32.mrf.mxu0
          %v895 = vpop.f32.mrf.mxu0
          %v896 = vadd.f32 0.0, %v895
          %v897 = vpop.f32.mrf.mxu0
          %898 = vmatprep.mubr.bf16.mxu0 %v556
          %899 = vmatmul.mubr.bf16.gmra.mxu0 %v555
          %v900 = vpop.f32.mrf.mxu0
          %v901 = vadd.f32 0.0, %v900
          %v902 = vpop.f32.mrf.mxu0
          %v903 = vpop.f32.mrf.mxu0
          %v904 = vadd.f32 0.0, %v903
          %v905 = vpop.f32.mrf.mxu0
          %906 = vdwg.mxu0
          %907 = vmatprep.subr.bf16.mxu0 %v857
          %908 = vmatpush1.bf16.xpose.msra.mxu0 %v856
          %909 = vmatprep.subr.bf16.mxu0 %v855
          %910 = vmatpush1.bf16.xpose.msra.mxu0 %v854
          %911 = vmatprep.subr.bf16.mxu0 %v853
          %912 = vmatpush1.bf16.xpose.msra.mxu0 %v852
          %913 = vmatprep.subr.bf16.mxu0 %v851
          %914 = vmatpush1.bf16.xpose.msra.mxu0 %v850
          %915 = vmatprep.subr.bf16.mxu0 %v849
          %916 = vmatpush1.bf16.xpose.msra.mxu0 %v848
          %917 = vmatprep.subr.bf16.mxu0 %v847
          %918 = vmatpush1.bf16.xpose.msra.mxu0 %v846
          %919 = vmatprep.subr.bf16.mxu0 %v845
          %920 = vmatpush1.bf16.xpose.msra.mxu0 %v844
          %921 = vmatprep.subr.bf16.mxu0 %v843
          %922 = vmatpush1.bf16.xpose.msra.mxu0 %v842
          %923 = vmatprep.subr.bf16.mxu0 0
          %924 = vmatpush2.bf16.xpose.msra.mxu0 0
          %925 = vmatprep.subr.bf16.mxu0 0
          %926 = vmatpush2.bf16.xpose.msra.mxu0 0
          %927 = vmatprep.subr.bf16.mxu0 0
          %928 = vmatpush2.bf16.xpose.msra.mxu0 0
          %929 = vmatprep.subr.bf16.mxu0 0
          %930 = vmatpush2.bf16.xpose.msra.mxu0 0
          %931 = vmatprep.subr.bf16.mxu0 0
          %932 = vmatpush2.bf16.xpose.msra.mxu0 0
          %933 = vmatprep.subr.bf16.mxu0 0
          %934 = vmatpush2.bf16.xpose.msra.mxu0 0
          %935 = vmatprep.subr.bf16.mxu0 0
          %936 = vmatpush2.bf16.xpose.msra.mxu0 0
          %937 = vmatprep.subr.bf16.mxu0 0
          %938 = vmatpush2.bf16.xpose.msra.mxu0 0
          %939 = vmatprep.mubr.bf16.mxu0 1065369472
          %940 = vmatmul.mubr.bf16.gmra.mxu0 1065369472
          %v941 = vpop.f32.mrf.mxu0
          %v942 = vadd.f32 0.0, %v941
          %v943 = vpop.f32.mrf.mxu0
          %v944 = vpop.f32.mrf.mxu0
          %v945 = vpop.f32.mrf.mxu0
          %946 = vdwg.mxu0
          %v947 = vrcp.pop %v942
          %v948 = vlaneseq
          %v949 = vshrl.u32 %v948, 7
          %v950 = vsub.s32 0, %v949
          %v951 = vrot.slane %v947, %v950
          %v952 = vmul.f32 %v893, %v951
          %v953 = vmul.f32 %v896, %v951
          %v954 = vmul.f32 %v901, %v951
          %v955 = vmul.f32 %v904, %v951
          %957 = vset.pattern.permute.xlu0 0
          %958 = vperm.xlu0 %957, %v407
          %v959 = vpop.permute.xlu0 %958
          %962 = vset.pattern.permute.xlu0 0
          %963 = vperm.xlu0 %962, %v408
          %v964 = vpop.permute.xlu0 %963
          %967 = vset.pattern.permute.xlu0 0
          %968 = vperm.xlu0 %967, %v409
          %v969 = vpop.permute.xlu0 %968
          %972 = vset.pattern.permute.xlu0 0
          %973 = vperm.xlu0 %972, %v410
          %v974 = vpop.permute.xlu0 %973
          %v976 = vmul.f32 %v952, %v959
          %v977 = vmul.f32 %v953, %v964
          %v978 = vmul.f32 %v954, %v969
          %v979 = vmul.f32 %v955, %v974
          %981 = vset.pattern.permute.xlu0 0
          %982 = vperm.xlu0 %981, %v411
          %v983 = vpop.permute.xlu0 %982
          %986 = vset.pattern.permute.xlu0 0
          %987 = vperm.xlu0 %986, %v412
          %v988 = vpop.permute.xlu0 %987
          %991 = vset.pattern.permute.xlu0 0
          %992 = vperm.xlu0 %991, %v413
          %v993 = vpop.permute.xlu0 %992
          %996 = vset.pattern.permute.xlu0 0
          %997 = vperm.xlu0 %996, %v414
          %v998 = vpop.permute.xlu0 %997
          %v1000 = vadd.f32 %v976, %v983
          %v1001 = vadd.f32 %v977, %v988
          %v1002 = vadd.f32 %v978, %v993
          %v1003 = vadd.f32 %v979, %v998
          %v1004 = vunpack.c.l.bf16 %v430
          %v1005 = vunpack.c.l.bf16 %v431
          %v1006 = vunpack.c.l.bf16 %v432
          %v1007 = vunpack.c.l.bf16 %v433
          %v1008 = vadd.f32 %v1000, %v1004
          %v1009 = vadd.f32 %v1001, %v1005
          %v1010 = vadd.f32 %v1002, %v1006
          %v1011 = vadd.f32 %v1003, %v1007
          %s1012 = smul.addr %s426, 8
          %s1013 = scalar_lea.vmem %s325, %s1012 [#allocation2]
          %1014 = vst [vmem:[%s1013] sm:$0xff] %v1008
          %1015 = vst [vmem:[%s1013 + $0x10] sm:$0xff] %v1009
          %1016 = vst [vmem:[%s1013 + $0x20] sm:$0xff] %v1010
          %1017 = vst [vmem:[%s1013 + $0x30] sm:$0xff] %v1011
          %1018 = vadd.xlane.f32.xlu0 %v1008
          %v1019 = vpop.xlane.xlu0 %1018
          %1020 = vadd.xlane.f32.xlu0 %v1009
          %v1021 = vpop.xlane.xlu0 %1020
          %1022 = vadd.xlane.f32.xlu0 %v1010
          %v1023 = vpop.xlane.xlu0 %1022
          %1024 = vadd.xlane.f32.xlu0 %v1011
          %v1025 = vpop.xlane.xlu0 %1024
          %v1026 = vadd.f32 %v421, %v1019
          %v1027 = vadd.f32 %v422, %v1021
          %v1028 = vadd.f32 %v423, %v1023
          %v1029 = vadd.f32 %v424, %v1025
        $region61: #{tpu_custom_call.1} parent=55 // loop_footer
          %s420 = sadd.s32 1, %s416
        $region62: #{tpu_custom_call.1} parent=55 // loop_footer_branch
          %415 = sbr.rel target = $region58
        $region63: #{tpu_custom_call.1} parent=55 // loop_exit
          _
        %v1030 = vmul.f32 %v421, 0.00390625
        %v1031 = vmul.f32 %v422, 0.00390625
        %v1032 = vmul.f32 %v423, 0.00390625
        %v1033 = vmul.f32 %v424, 0.00390625
        %v1034 = vld [vmem:[%s5] sm:$0x3]
        %v1035 = vld [vmem:[%s6] sm:$0x3]
        %v1037 = vsel %vm362, %v1034, 0
        %1039 = vmatprep.subr.mxu0 0.0
        %1040 = vmatpush1.msra.mxu0 0.0
        %1041 = vmatprep.subr.mxu0 0.0
        %1042 = vmatpush1.msra.mxu0 0.0
        %1043 = vmatprep.subr.mxu0 0.0
        %1044 = vmatpush1.msra.mxu0 0.0
        %1045 = vmatprep.subr.mxu0 0.0
        %1046 = vmatpush1.msra.mxu0 0.0
        %1047 = vmatprep.subr.mxu0 0.0
        %1048 = vmatpush1.msra.mxu0 0.0
        %1049 = vmatprep.subr.mxu0 0.0
        %1050 = vmatpush1.msra.mxu0 0.0
        %1051 = vmatprep.subr.mxu0 0.0
        %1052 = vmatpush1.msra.mxu0 0.0
        %1053 = vmatprep.subr.mxu0 0.0
        %1054 = vmatpush1.msra.mxu0 0.0
        %1055 = vmatprep.subr.mxu0 0.0
        %1056 = vmatpush1.msra.mxu0 0.0
        %1057 = vmatprep.subr.mxu0 0.0
        %1058 = vmatpush1.msra.mxu0 0.0
        %1059 = vmatprep.subr.mxu0 0.0
        %1060 = vmatpush1.msra.mxu0 0.0
        %1061 = vmatprep.subr.mxu0 0.0
        %1062 = vmatpush1.msra.mxu0 0.0
        %1063 = vmatprep.subr.mxu0 0.0
        %1064 = vmatpush1.msra.mxu0 %v1033
        %1065 = vmatprep.subr.mxu0 0.0
        %1066 = vmatpush1.msra.mxu0 %v1032
        %1067 = vmatprep.subr.mxu0 0.0
        %1068 = vmatpush1.msra.mxu0 %v1031
        %1069 = vmatprep.subr.mxu0 0.0
        %1070 = vmatpush1.msra.mxu0 %v1030
        %1071 = vmatprep.subr.mxu0 0.0
        %1072 = vmatpush2.msra.mxu0 0.0
        %1073 = vmatprep.subr.mxu0 0.0
        %1074 = vmatpush2.msra.mxu0 0.0
        %1075 = vmatprep.subr.mxu0 0.0
        %1076 = vmatpush2.msra.mxu0 0.0
        %1077 = vmatprep.subr.mxu0 0.0
        %1078 = vmatpush2.msra.mxu0 0.0
        %1079 = vmatprep.subr.mxu0 0.0
        %1080 = vmatpush2.msra.mxu0 0.0
        %1081 = vmatprep.subr.mxu0 0.0
        %1082 = vmatpush2.msra.mxu0 0.0
        %1083 = vmatprep.subr.mxu0 0.0
        %1084 = vmatpush2.msra.mxu0 0.0
        %1085 = vmatprep.subr.mxu0 0.0
        %1086 = vmatpush2.msra.mxu0 0.0
        %1087 = vmatprep.subr.mxu0 0.0
        %1088 = vmatpush2.msra.mxu0 0.0
        %1089 = vmatprep.subr.mxu0 0.0
        %1090 = vmatpush2.msra.mxu0 0.0
        %1091 = vmatprep.subr.mxu0 0.0
        %1092 = vmatpush2.msra.mxu0 0.0
        %1093 = vmatprep.subr.mxu0 0.0
        %1094 = vmatpush2.msra.mxu0 0.0
        %1095 = vmatprep.subr.mxu0 0.0
        %1096 = vmatpush2.msra.mxu0 0.0
        %1097 = vmatprep.subr.mxu0 0.0
        %1098 = vmatpush2.msra.mxu0 0.0
        %1099 = vmatprep.subr.mxu0 0.0
        %1100 = vmatpush2.msra.mxu0 0.0
        %1101 = vmatprep.subr.mxu0 0.0
        %1102 = vmatpush2.msra.mxu0 0.0
        %1103 = vmatprep.mubr.f32.mxu0 0.0
        %1104 = vmatmul.mubr.f32.gmra.mxu0 %v1037
        %v1105 = vpop.f32.mrf.mxu0
        %v1106 = vadd.f32 %v1035, %v1105
        %v1107 = vpop.f32.mrf.mxu0
        %1108 = vdwg.mxu0
        %v1109 = vmax.f32 %v1106, 0.0
        %v1110 = vld [vmem:[%s7] sm:$0xff]
        %v1111 = vld [vmem:[%s7 + $0x8] sm:$0xff]
        %v1112 = vld [vmem:[%s7 + $0x10] sm:$0xff]
        %v1113 = vld [vmem:[%s7 + $0x18] sm:$0xff]
        %v1114 = vld [vmem:[%s8] sm:$0xff]
        %v1115 = vld [vmem:[%s8 + $0x8] sm:$0xff]
        %v1116 = vld [vmem:[%s8 + $0x10] sm:$0xff]
        %v1117 = vld [vmem:[%s8 + $0x18] sm:$0xff]
        %vm1118 = vcmask 15360
        %v1120 = vsel %vm1118, %v1110, 0
        %v1123 = vsel %vm1118, %v1111, 0
        %v1126 = vsel %vm1118, %v1112, 0
        %v1129 = vsel %vm1118, %v1113, 0
        %vm1131 = vcmask 1041408
        %v1133 = vsel %vm1131, %v1109, 0
        %1135 = vmatprep.subr.mxu0 0.0
        %1136 = vmatpush1.msra.mxu0 0.0
        %1137 = vmatprep.subr.mxu0 0.0
        %1138 = vmatpush1.msra.mxu0 0.0
        %1139 = vmatprep.subr.mxu0 0.0
        %1140 = vmatpush1.msra.mxu0 0.0
        %1141 = vmatprep.subr.mxu0 0.0
        %1142 = vmatpush1.msra.mxu0 0.0
        %1143 = vmatprep.subr.mxu0 0.0
        %1144 = vmatpush1.msra.mxu0 0.0
        %1145 = vmatprep.subr.mxu0 0.0
        %1146 = vmatpush1.msra.mxu0 0.0
        %1147 = vmatprep.subr.mxu0 0.0
        %1148 = vmatpush1.msra.mxu0 0.0
        %1149 = vmatprep.subr.mxu0 0.0
        %1150 = vmatpush1.msra.mxu0 0.0
        %1151 = vmatprep.subr.mxu0 0.0
        %1152 = vmatpush1.msra.mxu0 0.0
        %1153 = vmatprep.subr.mxu0 0.0
        %1154 = vmatpush1.msra.mxu0 0.0
        %1155 = vmatprep.subr.mxu0 0.0
        %1156 = vmatpush1.msra.mxu0 0.0
        %1157 = vmatprep.subr.mxu0 0.0
        %1158 = vmatpush1.msra.mxu0 0.0
        %1159 = vmatprep.subr.mxu0 0.0
        %1160 = vmatpush1.msra.mxu0 0.0
        %1161 = vmatprep.subr.mxu0 0.0
        %1162 = vmatpush1.msra.mxu0 0.0
        %1163 = vmatprep.subr.mxu0 0.0
        %1164 = vmatpush1.msra.mxu0 0.0
        %1165 = vmatprep.subr.mxu0 0.0
        %1166 = vmatpush1.msra.mxu0 %v1133
        %1167 = vmatprep.subr.mxu0 0.0
        %1168 = vmatpush2.msra.mxu0 0.0
        %1169 = vmatprep.subr.mxu0 0.0
        %1170 = vmatpush2.msra.mxu0 0.0
        %1171 = vmatprep.subr.mxu0 0.0
        %1172 = vmatpush2.msra.mxu0 0.0
        %1173 = vmatprep.subr.mxu0 0.0
        %1174 = vmatpush2.msra.mxu0 0.0
        %1175 = vmatprep.subr.mxu0 0.0
        %1176 = vmatpush2.msra.mxu0 0.0
        %1177 = vmatprep.subr.mxu0 0.0
        %1178 = vmatpush2.msra.mxu0 0.0
        %1179 = vmatprep.subr.mxu0 0.0
        %1180 = vmatpush2.msra.mxu0 0.0
        %1181 = vmatprep.subr.mxu0 0.0
        %1182 = vmatpush2.msra.mxu0 0.0
        %1183 = vmatprep.subr.mxu0 0.0
        %1184 = vmatpush2.msra.mxu0 0.0
        %1185 = vmatprep.subr.mxu0 0.0
        %1186 = vmatpush2.msra.mxu0 0.0
        %1187 = vmatprep.subr.mxu0 0.0
        %1188 = vmatpush2.msra.mxu0 0.0
        %1189 = vmatprep.subr.mxu0 0.0
        %1190 = vmatpush2.msra.mxu0 0.0
        %1191 = vmatprep.subr.mxu0 0.0
        %1192 = vmatpush2.msra.mxu0 0.0
        %1193 = vmatprep.subr.mxu0 0.0
        %1194 = vmatpush2.msra.mxu0 0.0
        %1195 = vmatprep.subr.mxu0 0.0
        %1196 = vmatpush2.msra.mxu0 0.0
        %1197 = vmatprep.subr.mxu0 0.0
        %1198 = vmatpush2.msra.mxu0 0.0
        %1199 = vmatprep.mubr.f32.mxu0 0.0
        %1200 = vmatmul.mubr.f32.gmra.mxu0 %v1120
        %v1201 = vpop.f32.mrf.mxu0
        %v1202 = vadd.f32 %v1114, %v1201
        %v1203 = vpop.f32.mrf.mxu0
        %1204 = vmatprep.mubr.f32.mxu0 0.0
        %1205 = vmatmul.mubr.f32.gmra.mxu0 %v1123
        %v1206 = vpop.f32.mrf.mxu0
        %v1207 = vadd.f32 %v1115, %v1206
        %v1208 = vpop.f32.mrf.mxu0
        %1209 = vmatprep.mubr.f32.mxu0 0.0
        %1210 = vmatmul.mubr.f32.gmra.mxu0 %v1126
        %v1211 = vpop.f32.mrf.mxu0
        %v1212 = vadd.f32 %v1116, %v1211
        %v1213 = vpop.f32.mrf.mxu0
        %1214 = vmatprep.mubr.f32.mxu0 0.0
        %1215 = vmatmul.mubr.f32.gmra.mxu0 %v1129
        %v1216 = vpop.f32.mrf.mxu0
        %v1217 = vadd.f32 %v1117, %v1216
        %v1218 = vpop.f32.mrf.mxu0
        %1219 = vdwg.mxu0
        %v1220 = vsub.f32 0.0, %v1202
        %v1221 = vsub.f32 0.0, %v1207
        %v1222 = vsub.f32 0.0, %v1212
        %v1223 = vsub.f32 0.0, %v1217
        %v1224 = vmul.f32 %v1220, 1.442695
        %v1225 = vpow.pop %v1224
        %v1226 = vmul.f32 %v1221, 1.442695
        %v1227 = vpow.pop %v1226
        %v1228 = vmul.f32 %v1222, 1.442695
        %v1229 = vpow.pop %v1228
        %v1230 = vmul.f32 %v1223, 1.442695
        %v1231 = vpow.pop %v1230
        %v1232 = vadd.f32 %v1225, 1.0
        %v1233 = vadd.f32 %v1227, 1.0
        %v1234 = vadd.f32 %v1229, 1.0
        %v1235 = vadd.f32 %v1231, 1.0
        %v1236 = vrcp.pop %v1232
        %v1237 = vmul.f32 1.0, %v1236
        %v1238 = vrcp.pop %v1233
        %v1239 = vmul.f32 1.0, %v1238
        %v1240 = vrcp.pop %v1234
        %v1241 = vmul.f32 1.0, %v1240
        %v1242 = vrcp.pop %v1235
        %v1243 = vmul.f32 1.0, %v1242
        %v1244 = vld [vmem:[%s325] sm:$0xff]
        %v1245 = vld [vmem:[%s325 + $0x8] sm:$0xff]
        %v1246 = vld [vmem:[%s325 + $0x10] sm:$0xff]
        %v1247 = vld [vmem:[%s325 + $0x18] sm:$0xff]
        %v1248 = vld [vmem:[%s325 + $0x20] sm:$0xff]
        %v1249 = vld [vmem:[%s325 + $0x28] sm:$0xff]
        %v1250 = vld [vmem:[%s325 + $0x30] sm:$0xff]
        %v1251 = vld [vmem:[%s325 + $0x38] sm:$0xff]
        %1253 = vset.pattern.permute.xlu0 0
        %1254 = vperm.xlu0 %1253, %v1237
        %v1255 = vpop.permute.xlu0 %1254
        %1258 = vset.pattern.permute.xlu0 0
        %1259 = vperm.xlu0 %1258, %v1239
        %v1260 = vpop.permute.xlu0 %1259
        %1263 = vset.pattern.permute.xlu0 0
        %1264 = vperm.xlu0 %1263, %v1241
        %v1265 = vpop.permute.xlu0 %1264
        %1268 = vset.pattern.permute.xlu0 0
        %1269 = vperm.xlu0 %1268, %v1243
        %v1270 = vpop.permute.xlu0 %1269
        %v1272 = vmul.f32 %v1244, %v1255
        %v1273 = vmul.f32 %v1245, %v1255
        %v1274 = vmul.f32 %v1246, %v1260
        %v1275 = vmul.f32 %v1247, %v1260
        %v1276 = vmul.f32 %v1248, %v1265
        %v1277 = vmul.f32 %v1249, %v1265
        %v1278 = vmul.f32 %v1250, %v1270
        %v1279 = vmul.f32 %v1251, %v1270
        %1280 = vst [vmem:[%s325] sm:$0xff] %v1272
        %1281 = vst [vmem:[%s325 + $0x8] sm:$0xff] %v1273
        %1282 = vst [vmem:[%s325 + $0x10] sm:$0xff] %v1274
        %1283 = vst [vmem:[%s325 + $0x18] sm:$0xff] %v1275
        %1284 = vst [vmem:[%s325 + $0x20] sm:$0xff] %v1276
        %1285 = vst [vmem:[%s325 + $0x28] sm:$0xff] %v1277
        %1286 = vst [vmem:[%s325 + $0x30] sm:$0xff] %v1278
        %1287 = vst [vmem:[%s325 + $0x38] sm:$0xff] %v1279
        %s1288 = sand.u32 %s225, 1
        %s1289 = scalar_lea.sflag [#allocation3], %s1288
        %s1290 = sand.u32 %s225, 1
        %s1291 = smul.addr %s1290, 64
        %s1292 = scalar_lea.vmem [#allocation2], %s1291
        // Predicated region
        $region64: #{tpu_custom_call.1} parent=55 // pred_check
          %p1293 = pneg %p235
        $region65: #{tpu_custom_call.1} parent=55 // pred_check_branch
          %1295 = sbr.rel (%p1293) target = $region67
        $region66: #{tpu_custom_call.1} parent=55 // pred_region
          %s1297 = ssub.s32 1024, 1024
          %1298 = vsyncadd %s1289, %s1297
          %s1299 = smul.addr %s23, 8
          %s1300 = smul.addr %s1299, 128
          %s1301 = scalar_lea.hbm %s9, %s1300
          %s1302 = sshll.u32 %s1292, 4
          %s1303 = int_to_ptr.vmem [resolvable:$true] %s1302
          %1308 = dma.vmem_to_hbm [thread:$0]  %s1303, 1024, %s1301, %s1289, 256, 256, 16
        $region67: #{tpu_custom_call.1} parent=55 // pred_fallthru
          _
      $region56: #{tpu_custom_call.1} parent=5 // pred_fallthru
        _
      %p1309 = scmp.le.s32.totalorder 2, %s18
      // Predicated region
      $region68: #{tpu_custom_call.1} parent=5 // pred_check
        %p1310 = pneg %p1309
      $region69: #{tpu_custom_call.1} parent=5 // pred_check_branch
        %1312 = sbr.rel (%p1310) target = $region71
      $region70: #{tpu_custom_call.1} parent=5 // pred_region
        %s1313 = ssub.s32 %s18, 2
        // Predicated region
        $region72: #{tpu_custom_call.1} parent=70 // pred_check
          %p1314 = pneg %p241
        $region73: #{tpu_custom_call.1} parent=70 // pred_check_branch
          %1316 = sbr.rel (%p1314) target = $region75
        $region74: #{tpu_custom_call.1} parent=70 // pred_region
          %s1317 = sand.u32 %s226, 1
          %s1318 = scalar_lea.sflag [#allocation3], %s1317
          %s1319 = sand.u32 %s226, 1
          %s1320 = smul.addr %s1319, 64
          %s1321 = scalar_lea.vmem [#allocation2], %s1320
          %1322 = dma.done %s1318, 1024
        $region75: #{tpu_custom_call.1} parent=70 // pred_fallthru
          _
      $region71: #{tpu_custom_call.1} parent=5 // pred_fallthru
        _
    $region6: #{tpu_custom_call.1} parent=1 // loop_footer
      %s22 = sadd.s32 1, %s18
    $region7: #{tpu_custom_call.1} parent=1 // loop_footer_branch
      %17 = sbr.rel target = $region3
    $region8: #{tpu_custom_call.1} parent=1 // loop_exit
      _
    %1323 = vsyncpa [#allocation3], 1
    %s1324 = scalar_lea.sflag [#allocation3], 1
    %1325 = vsyncpa %s1324, 1

</llo_original>
